<compile_context>
chip_gen: v7x
topology: tpu7x:2x2x1
jax: 0.10.0
libtpu: 0.0.40
codegen_flags: <defaults>
</compile_context>

<pallas_src>
import jax
import jax.numpy as jnp
from jax.experimental import pallas as pl
from jax.experimental.pallas import tpu as pltpu


def _round_up(x, m):
    return ((x + m - 1) // m) * m


def _vmem_limit(estimate_bytes):
    # +50% margin, floor 16 MiB (>= v5e scoped default), cap below v7x physical.
    return int(min(max(estimate_bytes * 3 // 2, 16 << 20), 56 << 20))


def choose_tiles(n_spots, *, tm_max=512, tk_max=1024):
    """Row (tm) / contraction (tk) tiles for the adj stream.

    Large tiles approach the HBM roofline (~85% at 512-1024 vs ~63% at 256);
    tm is shrunk so the row grid has >= 2 tiles for moderate N, letting the
    "parallel" row axis shard across v7x's two TensorCores.
    """
    tk = min(tk_max, _round_up(n_spots, 128))
    if n_spots > tm_max:
        tm = tm_max
    elif n_spots >= 256:
        tm = _round_up(-(-n_spots // 2), 16)   # two row tiles
    else:
        tm = _round_up(n_spots, 16)
    return tm, tk


def prepare_adjacency(adj, *, tm, tk, compute_dtype=jnp.bfloat16):
    """One-time adj preparation: bf16 cast + (tm, tk) tile padding.

    adj is static across training steps; cache this result instead of
    re-casting/padding the dominant HBM stream on every forward call.
    The contraction-dim padding MUST be zeros (it feeds the accumulator).
    """
    n = adj.shape[0]
    assert adj.shape == (n, n)
    nr, nk = _round_up(n, tm), _round_up(n, tk)
    return jnp.pad(adj.astype(compute_dtype), ((0, nr - n), (0, nk - n)))


# ------------------------------- kernels ------------------------------------


def _fused_decoder_kernel(adj_ref, z_ref, w_ref, o_ref, acc_ref):
    # adj_ref: (tm, tk) bf16   z_ref: (tk, Lp) bf16   w_ref: (Lp, Gp) bf16
    # o_ref:   (tm, Gp) out    acc_ref: (tm, Lp) f32 scratch for h_4
    k = pl.program_id(1)
    partial = jnp.dot(adj_ref[...], z_ref[...], preferred_element_type=jnp.float32)

    @pl.when(k == 0)
    def _first():                      # direct write: no zero-init store+reload
        acc_ref[...] = partial

    @pl.when(k > 0)
    def _accum():
        acc_ref[...] += partial

    @pl.when(k == pl.num_programs(1) - 1)
    def _finalize():
        # Keep h_4 in f32 for the second matmul: the kernel is memory-bound so
        # the slower f32 MXU path is free and preserves accumulation precision.
        x = jnp.dot(acc_ref[...], w_ref[...].astype(jnp.float32),
                    preferred_element_type=jnp.float32)
        o_ref[...] = jnp.maximum(x, 0.0).astype(o_ref.dtype)


def _h_kernel(adj_ref, z_ref, h_ref):
    # h_ref (tm, Lp) f32 is the resident output accumulator for h_4 = adj @ z.
    k = pl.program_id(1)
    partial = jnp.dot(adj_ref[...], z_ref[...], preferred_element_type=jnp.float32)

    @pl.when(k == 0)
    def _first():
        h_ref[...] = partial

    @pl.when(k > 0)
    def _accum():
        h_ref[...] += partial


def _proj_kernel(h_ref, w_ref, o_ref):
    # h_ref: (tm, Lp) f32 resident across the G axis; w_ref: (Lp, tg) bf16.
    x = jnp.dot(h_ref[...], w_ref[...].astype(jnp.float32),
                preferred_element_type=jnp.float32)
    o_ref[...] = jnp.maximum(x, 0.0).astype(o_ref.dtype)


# ------------------------------- forward ------------------------------------


def fusemap_decoder_forward(z_spatial, adj_prepared, gene_embedding, var_index, *,
                            n_spots, tm, tk, tg=2048,
                            compute_dtype=jnp.bfloat16, out_dtype=None,
                            trim_genes=False, fused_vmem_budget=24 << 20):
    """relu((adj @ z_spatial) @ gene_embedding[:, var_index]).

    `adj_prepared` must come from `prepare_adjacency(adj, tm=tm, tk=tk)`.
    Returns (N, Gp) with lane-padded (zero) gene columns unless trim_genes.
    """
    N = n_spots
    Nr, Nk = adj_prepared.shape
    assert Nr % tm == 0 and Nk % tk == 0, "adj must be prepared with matching tm/tk"
    assert Nr >= N and Nk >= N
    assert tm % 16 == 0, "tm must be 16-aligned (bf16 sublane packing)"
    assert tk % 128 == 0, "tk must be 128-aligned (lane dim)"
    assert z_spatial.shape[0] == N

    L = z_spatial.shape[1]
    Lp = _round_up(L, 128)

    # Per-step glue (tiny next to adj): column gather of the learned gene
    # embedding, bf16 cast, lane padding of W and z.
    w = gene_embedding[:, var_index]                         # (L, G)
    G = w.shape[1]
    Gp = _round_up(G, 128)
    w_p = jnp.pad(w.astype(compute_dtype), ((0, Lp - L), (0, Gp - G)))
    z_p = jnp.pad(z_spatial.astype(compute_dtype), ((0, Nk - N), (0, Lp - L)))

    out_dtype = z_spatial.dtype if out_dtype is None else out_dtype
    out_bytes = jnp.dtype(out_dtype).itemsize
    out_rows = N if tm <= N else Nr          # partial last row block is masked

    # Estimated VMEM footprint of the fused (resident-W) path.
    fused_vmem = (2 * tm * tk * 2 + 2 * tk * Lp * 2 + 2 * Lp * Gp * 2
                  + 2 * tm * Gp * out_bytes + tm * Lp * 4)

    if fused_vmem <= fused_vmem_budget:
        # ---- fused single kernel: adj streamed once, W resident -------------
        cost = pl.CostEstimate(
            flops=2 * Nr * Nk * Lp + 2 * Nr * Lp * Gp,
            transcendentals=0,
            bytes_accessed=2 * (Nr * Nk + Nk * Lp + Lp * Gp)
                           + out_bytes * out_rows * Gp,
        )
        out = pl.pallas_call(
            _fused_decoder_kernel,
            out_shape=jax.ShapeDtypeStruct((out_rows, Gp), out_dtype),
            grid_spec=pltpu.PrefetchScalarGridSpec(
                num_scalar_prefetch=0,
                grid=(Nr // tm, Nk // tk),
                in_specs=[
                    pl.BlockSpec((tm, tk), lambda i, k: (i, k)),   # adj tile
                    pl.BlockSpec((tk, Lp), lambda i, k: (k, 0)),   # z tile
                    pl.BlockSpec((Lp, Gp), lambda i, k: (0, 0)),   # W resident
                ],
                out_specs=pl.BlockSpec((tm, Gp), lambda i, k: (i, 0)),
                scratch_shapes=[pltpu.VMEM((tm, Lp), jnp.float32)],
            ),
            compiler_params=pltpu.CompilerParams(
                dimension_semantics=("parallel", "arbitrary"),
                vmem_limit_bytes=_vmem_limit(fused_vmem),
            ),
            cost_estimate=cost,
        )(adj_prepared, z_p, w_p)
    else:
        # ---- large-G path: adj streamed once into small H, then tile G ------
        h_vmem = 2 * tm * tk * 2 + 2 * tk * Lp * 2 + 2 * tm * Lp * 4
        h = pl.pallas_call(
            _h_kernel,
            out_shape=jax.ShapeDtypeStruct((Nr, Lp), jnp.float32),
            grid_spec=pltpu.PrefetchScalarGridSpec(
                num_scalar_prefetch=0,
                grid=(Nr // tm, Nk // tk),
                in_specs=[
                    pl.BlockSpec((tm, tk), lambda i, k: (i, k)),
                    pl.BlockSpec((tk, Lp), lambda i, k: (k, 0)),
                ],
                out_specs=pl.BlockSpec((tm, Lp), lambda i, k: (i, 0)),
            ),
            compiler_params=pltpu.CompilerParams(
                dimension_semantics=("parallel", "arbitrary"),
                vmem_limit_bytes=_vmem_limit(h_vmem),
            ),
            cost_estimate=pl.CostEstimate(
                flops=2 * Nr * Nk * Lp, transcendentals=0,
                bytes_accessed=2 * (Nr * Nk + Nk * Lp) + 4 * Nr * Lp),
        )(adj_prepared, z_p)

        tg = min(tg, Gp)
        assert tg % 128 == 0
        grid_j = pl.cdiv(Gp, tg)                 # partial edge G block is masked
        proj_vmem = 2 * tm * Lp * 4 + 2 * Lp * tg * 2 + 2 * tm * tg * out_bytes
        out = pl.pallas_call(
            _proj_kernel,
            out_shape=jax.ShapeDtypeStruct((out_rows, Gp), out_dtype),
            grid_spec=pltpu.PrefetchScalarGridSpec(
                num_scalar_prefetch=0,
                grid=(Nr // tm, grid_j),
                in_specs=[
                    pl.BlockSpec((tm, Lp), lambda i, j: (i, 0)),   # H resident over j
                    pl.BlockSpec((Lp, tg), lambda i, j: (0, j)),   # W column tile
                ],
                out_specs=pl.BlockSpec((tm, tg), lambda i, j: (i, j)),
            ),
            compiler_params=pltpu.CompilerParams(
                dimension_semantics=("parallel", "parallel"),
                vmem_limit_bytes=_vmem_limit(proj_vmem),
            ),
            cost_estimate=pl.CostEstimate(
                flops=2 * Nr * Lp * Gp, transcendentals=0,
                bytes_accessed=4 * Nr * Lp + 2 * Lp * Gp
                               + out_bytes * out_rows * Gp),
        )(h, w_p)

    if out_rows > N:          # only for micro shapes where tm > N
        out = out[:N]
    if trim_genes:
        out = out[:, :G]
    return out


if __name__ == "__main__":
    key = jax.random.PRNGKey(0)
    k1, k2, k3, k4 = jax.random.split(key, 4)

    # Small, shape-consistent example.  N is NOT a multiple of 128 alignment of
    # some tiles and G is not a multiple of 128, exercising the padding paths.
    N = 384          # spots / cells
    L = 64           # latent dim
    G_total = 300    # genes in the shared embedding
    G = 200          # genes selected by var_index

    z_spatial = jax.random.normal(k1, (N, L), dtype=jnp.float32)
    adj = jax.random.uniform(k2, (N, N), dtype=jnp.float32)
    adj = adj / jnp.sum(adj, axis=1, keepdims=True)          # row-normalized graph

    gene_embedding = jax.random.normal(k3, (L, G_total), dtype=jnp.float32) * 0.1
    var_index = jax.random.permutation(k4, G_total)[:G].astype(jnp.int32)

    tm, tk = choose_tiles(N)                                  # (192, 384) here
    adj_prep = prepare_adjacency(adj, tm=tm, tk=tk)           # one-time, cached

    # Fused (resident-W) path; consumer keeps the lane-padded Gp columns.
    out = fusemap_decoder_forward(z_spatial, adj_prep, gene_embedding, var_index,
                                  n_spots=N, tm=tm, tk=tk)
    out = jax.block_until_ready(out)

    ref = jnp.maximum((adj @ z_spatial) @ gene_embedding[:, var_index], 0.0)
    Gp = _round_up(G, 128)
    assert out.shape == (N, Gp)
    assert jnp.allclose(out[:, :G], ref, atol=1e-2, rtol=1e-2), "fused path mismatch"
    assert bool(jnp.all(out[:, G:] == 0.0)), "gene padding columns must be zero"

    # Large-G two-kernel path, forced via a zero VMEM budget; trimmed output.
    out2 = fusemap_decoder_forward(z_spatial, adj_prep, gene_embedding, var_index,
                                   n_spots=N, tm=tm, tk=tk, tg=128,
                                   fused_vmem_budget=0, trim_genes=True)
    out2 = jax.block_until_ready(out2)
    assert out2.shape == (N, G)
    assert jnp.allclose(out2, ref, atol=1e-2, rtol=1e-2), "split path mismatch"

    print("KERNEL_OK")
</pallas_src>

<mosaic_0001>
module attributes {stable_mosaic.version = 11 : i64} {
  func.func @_fused_decoder_kernel(%arg0: i32, %arg1: i32, %arg2: memref<192x384xbf16, #tpu.memory_space<vmem>>, %arg3: memref<384x128xbf16, #tpu.memory_space<vmem>>, %arg4: memref<128x256xbf16, #tpu.memory_space<vmem>>, %arg5: memref<192x256xf32, #tpu.memory_space<vmem>>, %arg6: memref<192x128xf32, #tpu.memory_space<vmem>>) attributes {dimension_semantics = [#tpu.dimension_semantics<parallel>, #tpu.dimension_semantics<arbitrary>], iteration_bounds = array<i64: 2, 1>, scalar_prefetch = 0 : i64, scratch_operands = 1 : i64, tpu.core_type = #tpu.core_type<tc>, window_params = [{transform_indices = @transform_0, window_bounds = array<i64: 192, 384>}, {transform_indices = @transform_1, window_bounds = array<i64: 384, 128>}, {pipeline_mode = #tpu.pipeline_mode<synchronous>, transform_indices = @transform_2, window_bounds = array<i64: 128, 256>}, {transform_indices = @transform_3, window_bounds = array<i64: 192, 256>}]} {
    %c0 = arith.constant 0 : index
    %c0_0 = arith.constant 0 : index
    %0 = vector.load %arg2[%c0, %c0_0] : memref<192x384xbf16, #tpu.memory_space<vmem>>, vector<192x384xbf16>
    %c0_1 = arith.constant 0 : index
    %c0_2 = arith.constant 0 : index
    %1 = vector.load %arg3[%c0_1, %c0_2] : memref<384x128xbf16, #tpu.memory_space<vmem>>, vector<384x128xbf16>
    %cst = arith.constant dense<0.000000e+00> : vector<192x128xf32>
    %2 = tpu.matmul %0, %1, %cst {dimension_numbers = #tpu.dot_dimension_numbers<[1], [0], [0], [1], [0, 0, 1, 1], [], []>} : vector<192x384xbf16>, vector<384x128xbf16>, vector<192x128xf32> -> vector<192x128xf32>
    %c0_i32 = arith.constant 0 : i32
    %3 = arith.cmpi eq, %arg1, %c0_i32 : i32
    %4 = arith.extui %3 : i1 to i32
    %c0_i32_3 = arith.constant 0 : i32
    %5 = arith.cmpi ne, %4, %c0_i32_3 : i32
    scf.if %5 {
      %c0_8 = arith.constant 0 : index
      %c0_9 = arith.constant 0 : index
      %12 = vector.load %arg6[%c0_8, %c0_9] : memref<192x128xf32, #tpu.memory_space<vmem>>, vector<192x128xf32>
      tpu.vector_store %arg6[%c0_8, %c0_9], %2 {strides = array<i32>} : memref<192x128xf32, #tpu.memory_space<vmem>>, vector<192x128xf32>,
    } else {
    }
    %c0_i32_4 = arith.constant 0 : i32
    %6 = arith.cmpi sgt, %arg1, %c0_i32_4 : i32
    %7 = arith.extui %6 : i1 to i32
    %c0_i32_5 = arith.constant 0 : i32
    %8 = arith.cmpi ne, %7, %c0_i32_5 : i32
    scf.if %8 {
      %c0_8 = arith.constant 0 : index
      %c0_9 = arith.constant 0 : index
      %12 = vector.load %arg6[%c0_8, %c0_9] : memref<192x128xf32, #tpu.memory_space<vmem>>, vector<192x128xf32>
      %13 = arith.addf %12, %2 : vector<192x128xf32>
      %c0_10 = arith.constant 0 : index
      %c0_11 = arith.constant 0 : index
      %14 = vector.load %arg6[%c0_10, %c0_11] : memref<192x128xf32, #tpu.memory_space<vmem>>, vector<192x128xf32>
      tpu.vector_store %arg6[%c0_10, %c0_11], %13 {strides = array<i32>} : memref<192x128xf32, #tpu.memory_space<vmem>>, vector<192x128xf32>,
    } else {
    }
    %c0_i32_6 = arith.constant 0 : i32
    %9 = arith.cmpi eq, %arg1, %c0_i32_6 : i32
    %10 = arith.extui %9 : i1 to i32
    %c0_i32_7 = arith.constant 0 : i32
    %11 = arith.cmpi ne, %10, %c0_i32_7 : i32
    scf.if %11 {
      %c0_8 = arith.constant 0 : index
      %c0_9 = arith.constant 0 : index
      %12 = vector.load %arg6[%c0_8, %c0_9] : memref<192x128xf32, #tpu.memory_space<vmem>>, vector<192x128xf32>
      %c0_10 = arith.constant 0 : index
      %c0_11 = arith.constant 0 : index
      %13 = vector.load %arg4[%c0_10, %c0_11] : memref<128x256xbf16, #tpu.memory_space<vmem>>, vector<128x256xbf16>
      %14 = arith.extf %13 : vector<128x256xbf16> to vector<128x256xf32>
      %cst_12 = arith.constant dense<0.000000e+00> : vector<192x256xf32>
      %15 = tpu.matmul %12, %14, %cst_12 {dimension_numbers = #tpu.dot_dimension_numbers<[1], [0], [0], [1], [0, 0, 1, 1], [], []>} : vector<192x128xf32>, vector<128x256xf32>, vector<192x256xf32> -> vector<192x256xf32>
      %cst_13 = arith.constant 0.000000e+00 : f32
      %16 = vector.broadcast %cst_13 : f32 to vector<192x256xf32>
      %17 = arith.maximumf %15, %16 : vector<192x256xf32>
      %c0_14 = arith.constant 0 : index
      %c0_15 = arith.constant 0 : index
      %18 = vector.load %arg5[%c0_14, %c0_15] : memref<192x256xf32, #tpu.memory_space<vmem>>, vector<192x256xf32>
      tpu.vector_store %arg5[%c0_14, %c0_15], %17 {strides = array<i32>} : memref<192x256xf32, #tpu.memory_space<vmem>>, vector<192x256xf32>,
    } else {
    }
    return
  }
  func.func @transform_0(%arg0: i32, %arg1: i32) -> (i32, i32) {
    %c0_i32 = arith.constant 0 : i32
    return %arg0, %arg1 : i32, i32
  }
  func.func @transform_1(%arg0: i32, %arg1: i32) -> (i32, i32) {
    %c0_i32 = arith.constant 0 : i32
    %c0_i32_0 = arith.constant 0 : i32
    return %arg1, %c0_i32 : i32, i32
  }
  func.func @transform_2(%arg0: i32, %arg1: i32) -> (i32, i32) {
    %c0_i32 = arith.constant 0 : i32
    %c0_i32_0 = arith.constant 0 : i32
    %c0_i32_1 = arith.constant 0 : i32
    return %c0_i32, %c0_i32_0 : i32, i32
  }
  func.func @transform_3(%arg0: i32, %arg1: i32) -> (i32, i32) {
    %c0_i32 = arith.constant 0 : i32
    %c0_i32_0 = arith.constant 0 : i32
    return %arg0, %c0_i32 : i32, i32
  }
}

</mosaic_0001>

<llo_original>
// kernel: tpu_custom_call.1
$region0: #{tpu_custom_call.1}
  #allocation0 [shape = 'u32[]', space=smem, size = 0x4, offset = 0x4, fixed_abs, tag = 'smem constant byte address 0x4 - core index']
  #allocation1 [shape = 'u32[144,128]{1,0:T(1,128)}', space=vmem, size = 0x12000, scoped, tag = 'internal scratch']
  #allocation2 [shape = 'f32[192,128]{1,0:T(8,128)}', space=vmem, size = 0x18000, scoped, tag = 'scratch operand']
  %s0 = inlined_call_operand.hbm [shape: bf16[384,384], index: 0, kind: input, shape index: {}]
  %s1 = inlined_call_operand.hbm [shape: bf16[384,128], index: 1, kind: input, shape index: {}]
  %s2 = inlined_call_operand.hbm [shape: bf16[128,256], index: 2, kind: input, shape index: {}]
  %s3 = inlined_call_operand.hbm [shape: f32[384,256], index: 3, kind: output, shape index: {}]
  %s4 = sld [smem:[#allocation0]]
  $region69: #{tpu_custom_call.1} parent=0
    _
  %s6 = ssub.s32 1, %s4
  %s7 = scalar_select 0, %s6, %s4
  $region1: #{tpu_custom_call.1} parent=0
    #allocation3 [shape = 'u8[294912]{0}', space=vmem, size = 0x48000, scoped, tag = 'input window, operand 0']
    #allocation4 [shape = 's32[2]{0}', space=sflag, size = 0x8, scoped, tag = 'scoped memory for tpu_custom_call.1']
    #allocation5 [shape = 's32[2]{0}', space=sflag, size = 0x8, scoped, tag = 'scoped memory for tpu_custom_call.1']
    #allocation6 [shape = 'u8[98304]{0}', space=vmem, size = 0x18000, scoped, tag = 'input window, operand 1, single buffered']
    #allocation7 [shape = 's32[1]{0}', space=sflag, size = 0x4, scoped, tag = 'scoped memory for tpu_custom_call.1']
    #allocation8 [shape = 'u8[65536]{0}', space=vmem, size = 0x10000, scoped, tag = 'input window, operand 2, single buffered']
    #allocation9 [shape = 'u8[393216]{0}', space=vmem, size = 0x60000, scoped, tag = 'output window, operand 0']
    %8 = vsyncpa [#allocation4], 0
    %s9 = scalar_lea.sflag [#allocation4], 1
    %10 = vsyncpa %s9, 0
    %11 = vsyncpa [#allocation7], 0
    %12 = vsyncpa [#allocation5], 0
    %s13 = scalar_lea.sflag [#allocation5], 1
    %14 = vsyncpa %s13, 0
    loop: start=0, step=1, limit=4
    $region2: #{tpu_custom_call.1} parent=1 // loop_pre_header
      _
    $region3: #{tpu_custom_call.1} parent=1 // loop_header
      %s16 = sphi 0, %s20
      %p17 = scmp.ge.s32.totalorder %s16, 4
      %s23 = sphi 0, %s35
      %s24 = sphi 0, %s31
      %s25 = sphi 0, %s23
      %s26 = sphi 0, %s24
      %s27 = sphi 0, %s25
      %s28 = sphi 0, %s26
      %s40 = sphi 0, %s42
      %s43 = sphi 0, %s40
      %s44 = sphi 0, %s43
      %s60 = sphi 0, %s44
      %s66 = sphi 0, %s68
      %s69 = sphi 0, %s66
      %s70 = sphi 0, %s69
      %s86 = sphi 0, %s70
      %s90 = sphi 0, %s90
      %s92 = sphi 0, %s90
      %s93 = sphi 0, %s92
      %s107 = sphi 0, %s93
      %s113 = sphi 0, %s115
      %s116 = sphi 0, %s113
      %s117 = sphi 0, %s116
      %s133 = sphi 0, %s117
    $region4: #{tpu_custom_call.1} parent=1 // loop_header_branch
      %19 = sbr.rel (%p17) target = $region8
    $region5: #{tpu_custom_call.1} parent=1 // loop_body
      %s21 = ssub.s32 %s16, 1
      %s22 = ssub.s32 %s16, 2
      %s29 = sadd.s32 1, %s24
      %p30 = scmp.ge.s32.totalorder %s29, 1
      %s31 = scalar_select %p30, 0, %s29
      %s32 = sadd.s32 1, %s23
      %s33 = scalar_select %p30, %s32, %s23
      %p34 = scmp.ge.s32.totalorder %s33, 2
      %s35 = scalar_select %p34, 0, %s33
      %s36 = ssub.s32 %s23, %s35
      %s37 = ssub.s32 %s24, %s31
      %s38 = sor.u32 %s36, %s37
      %p39 = scmp.eq.s32.totalorder %s38, 0
      %s41 = sadd.s32 %s40, 1
      %s42 = scalar_select %p39, %s40, %s41
      %p45 = pneg %p39
      %p46 = scmp.eq.s32.totalorder %s16, 1
      %p47 = por %p45, %p46
      %p48 = scmp.ne.s32.totalorder %s40, %s43
      %p49 = scmp.eq.s32.totalorder %s16, 0
      %p50 = por %p48, %p49
      %p51 = scmp.ne.s32.totalorder %s40, %s43
      %p52 = scmp.eq.s32.totalorder %s21, 1
      %p53 = por %p51, %p52
      %p54 = scmp.ne.s32.totalorder %s43, %s44
      %p55 = scmp.eq.s32.totalorder %s21, 0
      %p56 = por %p54, %p55
      %p57 = scmp.ne.s32.totalorder %s43, %s44
      %p58 = scmp.eq.s32.totalorder %s22, 1
      %p59 = por %p57, %p58
      %p61 = scmp.ne.s32.totalorder %s44, %s60
      %p62 = scmp.eq.s32.totalorder %s22, 0
      %p63 = por %p61, %p62
      %s64 = ssub.s32 %s24, %s31
      %p65 = scmp.eq.s32.totalorder %s64, 0
      %s67 = sadd.s32 %s66, 1
      %s68 = scalar_select %p65, %s66, %s67
      %p71 = pneg %p65
      %p72 = scmp.eq.s32.totalorder %s16, 1
      %p73 = por %p71, %p72
      %p74 = scmp.ne.s32.totalorder %s66, %s69
      %p75 = scmp.eq.s32.totalorder %s16, 0
      %p76 = por %p74, %p75
      %p77 = scmp.ne.s32.totalorder %s66, %s69
      %p78 = scmp.eq.s32.totalorder %s21, 1
      %p79 = por %p77, %p78
      %p80 = scmp.ne.s32.totalorder %s69, %s70
      %p81 = scmp.eq.s32.totalorder %s21, 0
      %p82 = por %p80, %p81
      %p83 = scmp.ne.s32.totalorder %s69, %s70
      %p84 = scmp.eq.s32.totalorder %s22, 1
      %p85 = por %p83, %p84
      %p87 = scmp.ne.s32.totalorder %s70, %s86
      %p88 = scmp.eq.s32.totalorder %s22, 0
      %p89 = por %p87, %p88
      %s91 = sadd.s32 %s90, 1
      %p94 = scmp.eq.s32.totalorder %s16, 1
      %p95 = scmp.ne.s32.totalorder %s90, %s92
      %p96 = scmp.eq.s32.totalorder %s16, 0
      %p97 = por %p95, %p96
      %p98 = scmp.ne.s32.totalorder %s90, %s92
      %p99 = scmp.eq.s32.totalorder %s21, 1
      %p100 = por %p98, %p99
      %p101 = scmp.ne.s32.totalorder %s92, %s93
      %p102 = scmp.eq.s32.totalorder %s21, 0
      %p103 = por %p101, %p102
      %p104 = scmp.ne.s32.totalorder %s92, %s93
      %p105 = scmp.eq.s32.totalorder %s22, 1
      %p106 = por %p104, %p105
      %p108 = scmp.ne.s32.totalorder %s93, %s107
      %p109 = scmp.eq.s32.totalorder %s22, 0
      %p110 = por %p108, %p109
      %s111 = ssub.s32 %s23, %s35
      %p112 = scmp.eq.s32.totalorder %s111, 0
      %s114 = sadd.s32 %s113, 1
      %s115 = scalar_select %p112, %s113, %s114
      %p118 = pneg %p112
      %p119 = scmp.eq.s32.totalorder %s16, 1
      %p120 = por %p118, %p119
      %p121 = scmp.ne.s32.totalorder %s113, %s116
      %p122 = scmp.eq.s32.totalorder %s16, 0
      %p123 = por %p121, %p122
      %p124 = scmp.ne.s32.totalorder %s113, %s116
      %p125 = scmp.eq.s32.totalorder %s21, 1
      %p126 = por %p124, %p125
      %p127 = scmp.ne.s32.totalorder %s116, %s117
      %p128 = scmp.eq.s32.totalorder %s21, 0
      %p129 = por %p127, %p128
      %p130 = scmp.ne.s32.totalorder %s116, %s117
      %p131 = scmp.eq.s32.totalorder %s22, 1
      %p132 = por %p130, %p131
      %p134 = scmp.ne.s32.totalorder %s117, %s133
      %p135 = scmp.eq.s32.totalorder %s22, 0
      %p136 = por %p134, %p135
      %p137 = scmp.le.s32.totalorder 1, %s16
      %p138 = scmp.lt.s32.totalorder %s16, 3
      %p139 = pnand %p137, %p138
      %p140 = pneg %p139
      // Predicated region
      $region9: #{tpu_custom_call.1} parent=5 // pred_check
        _
      $region10: #{tpu_custom_call.1} parent=5 // pred_check_branch
        %142 = sbr.rel (%p139) target = $region12
      $region11: #{tpu_custom_call.1} parent=5 // pred_region
        %s143 = ssub.s32 %s16, 1
        // Predicated region
        $region13: #{tpu_custom_call.1} parent=11 // pred_check
          %p144 = pneg %p82
        $region14: #{tpu_custom_call.1} parent=11 // pred_check_branch
          %146 = sbr.rel (%p144) target = $region16
        $region15: #{tpu_custom_call.1} parent=11 // pred_region
          %s147 = smul.u32 48, %s26
          %s149 = ssub.s32 3072, 3072
          %150 = vsyncadd [#allocation7], %s149
          %s151 = smul.addr %s147, 64
          %s152 = scalar_lea.hbm %s1, %s151
          %s153 = sshll.u32 [#allocation6], 4
          %s154 = int_to_ptr.vmem [resolvable:$true] %s153
          %159 = dma.hbm_to_vmem [thread:$0]  %s152, 3072, %s154, [#allocation7], 64, 64, 4
        $region16: #{tpu_custom_call.1} parent=11 // pred_fallthru
          _
        // Predicated region
        $region17: #{tpu_custom_call.1} parent=11 // pred_check
          %p160 = pneg %p103
        $region18: #{tpu_custom_call.1} parent=11 // pred_check_branch
          %162 = sbr.rel (%p160) target = $region20
        $region19: #{tpu_custom_call.1} parent=11 // pred_region
          %s164 = ssub.s32 2048, 2048
          %165 = vsyncadd [#allocation7], %s164
          %s166 = sshll.u32 [#allocation8], 4
          %s167 = int_to_ptr.vmem [resolvable:$true] %s166
          %172 = dma.hbm_to_vmem [thread:$0]  %s2, 2048, %s167, [#allocation7], 128, 128, 8
        $region20: #{tpu_custom_call.1} parent=11 // pred_fallthru
          _
      $region12: #{tpu_custom_call.1} parent=5 // pred_fallthru
        _
      %p173 = scmp.lt.s32.totalorder %s16, 2
      // Predicated region
      $region21: #{tpu_custom_call.1} parent=5 // pred_check
        %p174 = pneg %p173
      $region22: #{tpu_custom_call.1} parent=5 // pred_check_branch
        %176 = sbr.rel (%p174) target = $region24
      $region23: #{tpu_custom_call.1} parent=5 // pred_region
        // Predicated region
        $region25: #{tpu_custom_call.1} parent=23 // pred_check
          %p177 = pneg %p50
        $region26: #{tpu_custom_call.1} parent=23 // pred_check_branch
          %179 = sbr.rel (%p177) target = $region28
        $region27: #{tpu_custom_call.1} parent=23 // pred_region
          %s180 = sand.u32 %s40, 1
          %s181 = scalar_lea.sflag [#allocation4], %s180
          %s182 = sand.u32 %s40, 1
          %s183 = smul.addr %s182, 288
          %s184 = scalar_lea.vmem [#allocation3], %s183
          %s185 = smul.u32 24, %s23
          %s186 = smul.u32 3, %s24
          %s188 = ssub.s32 4608, 4608
          %189 = vsyncadd %s181, %s188
          %s190 = smul.addr %s185, 3
          %s191 = sadd.s32 %s186, %s190
          %s192 = smul.addr %s191, 64
          %s193 = scalar_lea.hbm %s0, %s192
          %s194 = sshll.u32 %s184, 4
          %s195 = int_to_ptr.vmem [resolvable:$true] %s194
          %200 = dma.hbm_to_vmem [thread:$0]  %s193, 4608, %s195, %s181, 192, 192, 12
        $region28: #{tpu_custom_call.1} parent=23 // pred_fallthru
          _
      $region24: #{tpu_custom_call.1} parent=5 // pred_fallthru
        _
      %p201 = scmp.le.s32.totalorder 1, %s16
      %p202 = scmp.lt.s32.totalorder %s16, 3
      %p203 = pnand %p201, %p202
      %p204 = pneg %p203
      // Predicated region
      $region29: #{tpu_custom_call.1} parent=5 // pred_check
        _
      $region30: #{tpu_custom_call.1} parent=5 // pred_check_branch
        %206 = sbr.rel (%p203) target = $region32
      $region31: #{tpu_custom_call.1} parent=5 // pred_region
        %s207 = ssub.s32 %s16, 1
        %s208 = sand.u32 %s43, 1
        %s209 = scalar_lea.sflag [#allocation4], %s208
        %s210 = sand.u32 %s43, 1
        %s211 = smul.addr %s210, 288
        %s212 = scalar_lea.vmem [#allocation3], %s211
        // Predicated region
        $region33: #{tpu_custom_call.1} parent=31 // pred_check
          %p213 = pneg %p56
        $region34: #{tpu_custom_call.1} parent=31 // pred_check_branch
          %215 = sbr.rel (%p213) target = $region36
        $region35: #{tpu_custom_call.1} parent=31 // pred_region
          %216 = dma.done %s209, 4608
        $region36: #{tpu_custom_call.1} parent=31 // pred_fallthru
          _
        // Predicated region
        $region37: #{tpu_custom_call.1} parent=31 // pred_check
          %p217 = pneg %p82
        $region38: #{tpu_custom_call.1} parent=31 // pred_check_branch
          %219 = sbr.rel (%p217) target = $region40
        $region39: #{tpu_custom_call.1} parent=31 // pred_region
          %220 = dma.done [#allocation7], 3072
        $region40: #{tpu_custom_call.1} parent=31 // pred_fallthru
          _
        // Predicated region
        $region41: #{tpu_custom_call.1} parent=31 // pred_check
          %p221 = pneg %p103
        $region42: #{tpu_custom_call.1} parent=31 // pred_check_branch
          %223 = sbr.rel (%p221) target = $region44
        $region43: #{tpu_custom_call.1} parent=31 // pred_region
          %224 = dma.done [#allocation7], 2048
        $region44: #{tpu_custom_call.1} parent=31 // pred_fallthru
          _
        %s225 = sand.u32 %s43, 1
        %s226 = scalar_lea.sflag [#allocation4], %s225
        %s227 = sand.u32 %s43, 1
        %s228 = smul.addr %s227, 288
        %s229 = scalar_lea.vmem [#allocation3], %s228
        %p230 = pneg %p56
        %p231 = pneg %p53
        %p232 = pneg %p82
        %p233 = pneg %p79
        %p234 = pneg %p103
        %p235 = pneg %p100
        %p236 = pneg %p129
        %p237 = pneg %p126
        %s238 = sand.u32 %s116, 1
        %s239 = scalar_lea.sflag [#allocation5], %s238
        %s240 = sand.u32 %s116, 1
        %s241 = smul.addr %s240, 384
        %s242 = scalar_lea.vmem [#allocation9], %s241
        %s243 = smul.u32 24, %s25
        %s244 = smul.u32 3, %s26
        %s245 = smul.u32 48, %s26
        %s246 = smul.u32 24, %s25
        %v248 = vld [vmem:[%s212] sm:$0xff]
        %v249 = vld [vmem:[%s212 + $0x8] sm:$0xf]
        %v250 = vld [vmem:[%s212 + $0xc] sm:$0xff]
        %v251 = vld [vmem:[%s212 + $0x14] sm:$0xf]
        %v252 = vld [vmem:[%s212 + $0x18] sm:$0xff]
        %v253 = vld [vmem:[%s212 + $0x20] sm:$0xf]
        %v254 = vld [vmem:[%s212 + $0x24] sm:$0xff]
        %v255 = vld [vmem:[%s212 + $0x2c] sm:$0xf]
        %v256 = vld [vmem:[%s212 + $0x30] sm:$0xff]
        %v257 = vld [vmem:[%s212 + $0x38] sm:$0xf]
        %v258 = vld [vmem:[%s212 + $0x3c] sm:$0xff]
        %v259 = vld [vmem:[%s212 + $0x44] sm:$0xf]
        %v260 = vld [vmem:[%s212 + $0x48] sm:$0xff]
        %v261 = vld [vmem:[%s212 + $0x50] sm:$0xf]
        %v262 = vld [vmem:[%s212 + $0x54] sm:$0xff]
        %v263 = vld [vmem:[%s212 + $0x5c] sm:$0xf]
        %v264 = vld [vmem:[%s212 + $0x60] sm:$0xff]
        %v265 = vld [vmem:[%s212 + $0x68] sm:$0xf]
        %v266 = vld [vmem:[%s212 + $0x6c] sm:$0xff]
        %v267 = vld [vmem:[%s212 + $0x74] sm:$0xf]
        %v268 = vld [vmem:[%s212 + $0x78] sm:$0xff]
        %v269 = vld [vmem:[%s212 + $0x80] sm:$0xf]
        %v270 = vld [vmem:[%s212 + $0x84] sm:$0xff]
        %v271 = vld [vmem:[%s212 + $0x8c] sm:$0xf]
        %v272 = vld [vmem:[%s212 + $0x90] sm:$0xff]
        %v273 = vld [vmem:[%s212 + $0x98] sm:$0xf]
        %v274 = vld [vmem:[%s212 + $0x9c] sm:$0xff]
        %v275 = vld [vmem:[%s212 + $0xa4] sm:$0xf]
        %v276 = vld [vmem:[%s212 + $0xa8] sm:$0xff]
        %v277 = vld [vmem:[%s212 + $0xb0] sm:$0xf]
        %v278 = vld [vmem:[%s212 + $0xb4] sm:$0xff]
        %v279 = vld [vmem:[%s212 + $0xbc] sm:$0xf]
        %v280 = vld [vmem:[%s212 + $0xc0] sm:$0xff]
        %v281 = vld [vmem:[%s212 + $0xc8] sm:$0xf]
        %v282 = vld [vmem:[%s212 + $0xcc] sm:$0xff]
        %v283 = vld [vmem:[%s212 + $0xd4] sm:$0xf]
        %v284 = vld [vmem:[%s212 + $0xd8] sm:$0xff]
        %v285 = vld [vmem:[%s212 + $0xe0] sm:$0xf]
        %v286 = vld [vmem:[%s212 + $0xe4] sm:$0xff]
        %v287 = vld [vmem:[%s212 + $0xec] sm:$0xf]
        %v288 = vld [vmem:[%s212 + $0xf0] sm:$0xff]
        %v289 = vld [vmem:[%s212 + $0xf8] sm:$0xf]
        %v290 = vld [vmem:[%s212 + $0xfc] sm:$0xff]
        %v291 = vld [vmem:[%s212 + $0x104] sm:$0xf]
        %v292 = vld [vmem:[%s212 + $0x108] sm:$0xff]
        %v293 = vld [vmem:[%s212 + $0x110] sm:$0xf]
        %v294 = vld [vmem:[%s212 + $0x114] sm:$0xff]
        %v295 = vld [vmem:[%s212 + $0x11c] sm:$0xf]
        %v296 = vld [vmem:[#allocation6] sm:$0xf]
        %v297 = vld [vmem:[#allocation6 + $0x4] sm:$0xf]
        %v298 = vld [vmem:[#allocation6 + $0x8] sm:$0xf]
        %v299 = vld [vmem:[#allocation6 + $0xc] sm:$0xf]
        %v300 = vld [vmem:[#allocation6 + $0x10] sm:$0xf]
        %v301 = vld [vmem:[#allocation6 + $0x14] sm:$0xf]
        %v302 = vld [vmem:[#allocation6 + $0x18] sm:$0xf]
        %v303 = vld [vmem:[#allocation6 + $0x1c] sm:$0xf]
        %v304 = vld [vmem:[#allocation6 + $0x20] sm:$0xf]
        %v305 = vld [vmem:[#allocation6 + $0x24] sm:$0xf]
        %v306 = vld [vmem:[#allocation6 + $0x28] sm:$0xf]
        %v307 = vld [vmem:[#allocation6 + $0x2c] sm:$0xf]
        %v308 = vld [vmem:[#allocation6 + $0x30] sm:$0xf]
        %v309 = vld [vmem:[#allocation6 + $0x34] sm:$0xf]
        %v310 = vld [vmem:[#allocation6 + $0x38] sm:$0xf]
        %v311 = vld [vmem:[#allocation6 + $0x3c] sm:$0xf]
        %v312 = vld [vmem:[#allocation6 + $0x40] sm:$0xf]
        %v313 = vld [vmem:[#allocation6 + $0x44] sm:$0xf]
        %v314 = vld [vmem:[#allocation6 + $0x48] sm:$0xf]
        %v315 = vld [vmem:[#allocation6 + $0x4c] sm:$0xf]
        %v316 = vld [vmem:[#allocation6 + $0x50] sm:$0xf]
        %v317 = vld [vmem:[#allocation6 + $0x54] sm:$0xf]
        %v318 = vld [vmem:[#allocation6 + $0x58] sm:$0xf]
        %v319 = vld [vmem:[#allocation6 + $0x5c] sm:$0xf]
        %v320 = vld [vmem:[#allocation6 + $0x60] sm:$0xf]
        %v321 = vld [vmem:[#allocation6 + $0x64] sm:$0xf]
        %v322 = vld [vmem:[#allocation6 + $0x68] sm:$0xf]
        %v323 = vld [vmem:[#allocation6 + $0x6c] sm:$0xf]
        %v324 = vld [vmem:[#allocation6 + $0x70] sm:$0xf]
        %v325 = vld [vmem:[#allocation6 + $0x74] sm:$0xf]
        %v326 = vld [vmem:[#allocation6 + $0x78] sm:$0xf]
        %v327 = vld [vmem:[#allocation6 + $0x7c] sm:$0xf]
        %v328 = vld [vmem:[#allocation6 + $0x80] sm:$0xf]
        %v329 = vld [vmem:[#allocation6 + $0x84] sm:$0xf]
        %v330 = vld [vmem:[#allocation6 + $0x88] sm:$0xf]
        %v331 = vld [vmem:[#allocation6 + $0x8c] sm:$0xf]
        %v332 = vld [vmem:[#allocation6 + $0x90] sm:$0xf]
        %v333 = vld [vmem:[#allocation6 + $0x94] sm:$0xf]
        %v334 = vld [vmem:[#allocation6 + $0x98] sm:$0xf]
        %v335 = vld [vmem:[#allocation6 + $0x9c] sm:$0xf]
        %v336 = vld [vmem:[#allocation6 + $0xa0] sm:$0xf]
        %v337 = vld [vmem:[#allocation6 + $0xa4] sm:$0xf]
        %v338 = vld [vmem:[#allocation6 + $0xa8] sm:$0xf]
        %v339 = vld [vmem:[#allocation6 + $0xac] sm:$0xf]
        %v340 = vld [vmem:[#allocation6 + $0xb0] sm:$0xf]
        %v341 = vld [vmem:[#allocation6 + $0xb4] sm:$0xf]
        %v342 = vld [vmem:[#allocation6 + $0xb8] sm:$0xf]
        %v343 = vld [vmem:[#allocation6 + $0xbc] sm:$0xf]
        %v392 = vunpack.c.l.b16 %v248
        %v393 = vunpack.c.h.b16 %v248
        %v394 = vunpack.c.l.b16 %v249
        %v395 = vunpack.c.l.b16 %v250
        %v396 = vunpack.c.h.b16 %v250
        %v397 = vunpack.c.l.b16 %v251
        %v398 = vunpack.c.l.b16 %v252
        %v399 = vunpack.c.h.b16 %v252
        %v400 = vunpack.c.l.b16 %v253
        %v401 = vunpack.c.l.b16 %v254
        %v402 = vunpack.c.h.b16 %v254
        %v403 = vunpack.c.l.b16 %v255
        %v404 = vunpack.c.l.b16 %v256
        %v405 = vunpack.c.h.b16 %v256
        %v406 = vunpack.c.l.b16 %v257
        %v407 = vunpack.c.l.b16 %v258
        %v408 = vunpack.c.h.b16 %v258
        %v409 = vunpack.c.l.b16 %v259
        %v410 = vunpack.c.l.b16 %v260
        %v411 = vunpack.c.h.b16 %v260
        %v412 = vunpack.c.l.b16 %v261
        %v413 = vunpack.c.l.b16 %v262
        %v414 = vunpack.c.h.b16 %v262
        %v415 = vunpack.c.l.b16 %v263
        %v416 = vunpack.c.l.b16 %v264
        %v417 = vunpack.c.h.b16 %v264
        %v418 = vunpack.c.l.b16 %v265
        %v419 = vunpack.c.l.b16 %v266
        %v420 = vunpack.c.h.b16 %v266
        %v421 = vunpack.c.l.b16 %v267
        %v422 = vunpack.c.l.b16 %v268
        %v423 = vunpack.c.h.b16 %v268
        %v424 = vunpack.c.l.b16 %v269
        %v425 = vunpack.c.l.b16 %v270
        %v426 = vunpack.c.h.b16 %v270
        %v427 = vunpack.c.l.b16 %v271
        %v428 = vunpack.c.l.b16 %v272
        %v429 = vunpack.c.h.b16 %v272
        %v430 = vunpack.c.l.b16 %v273
        %v431 = vunpack.c.l.b16 %v274
        %v432 = vunpack.c.h.b16 %v274
        %v433 = vunpack.c.l.b16 %v275
        %v434 = vunpack.c.l.b16 %v276
        %v435 = vunpack.c.h.b16 %v276
        %v436 = vunpack.c.l.b16 %v277
        %v437 = vunpack.c.l.b16 %v278
        %v438 = vunpack.c.h.b16 %v278
        %v439 = vunpack.c.l.b16 %v279
        %v440 = vunpack.c.l.b16 %v280
        %v441 = vunpack.c.h.b16 %v280
        %v442 = vunpack.c.l.b16 %v281
        %v443 = vunpack.c.l.b16 %v282
        %v444 = vunpack.c.h.b16 %v282
        %v445 = vunpack.c.l.b16 %v283
        %v446 = vunpack.c.l.b16 %v284
        %v447 = vunpack.c.h.b16 %v284
        %v448 = vunpack.c.l.b16 %v285
        %v449 = vunpack.c.l.b16 %v286
        %v450 = vunpack.c.h.b16 %v286
        %v451 = vunpack.c.l.b16 %v287
        %v452 = vunpack.c.l.b16 %v288
        %v453 = vunpack.c.h.b16 %v288
        %v454 = vunpack.c.l.b16 %v289
        %v455 = vunpack.c.l.b16 %v290
        %v456 = vunpack.c.h.b16 %v290
        %v457 = vunpack.c.l.b16 %v291
        %v458 = vunpack.c.l.b16 %v292
        %v459 = vunpack.c.h.b16 %v292
        %v460 = vunpack.c.l.b16 %v293
        %v461 = vunpack.c.l.b16 %v294
        %v462 = vunpack.c.h.b16 %v294
        %v463 = vunpack.c.l.b16 %v295
        %v464 = vpack.c.b16 %v395, %v392
        %v465 = vpack.c.b16 %v396, %v393
        %v466 = vpack.c.b16 %v397, %v394
        %v467 = vpack.c.b16 %v401, %v398
        %v468 = vpack.c.b16 %v402, %v399
        %v469 = vpack.c.b16 %v403, %v400
        %v470 = vpack.c.b16 %v407, %v404
        %v471 = vpack.c.b16 %v408, %v405
        %v472 = vpack.c.b16 %v409, %v406
        %v473 = vpack.c.b16 %v413, %v410
        %v474 = vpack.c.b16 %v414, %v411
        %v475 = vpack.c.b16 %v415, %v412
        %v476 = vpack.c.b16 %v419, %v416
        %v477 = vpack.c.b16 %v420, %v417
        %v478 = vpack.c.b16 %v421, %v418
        %v479 = vpack.c.b16 %v425, %v422
        %v480 = vpack.c.b16 %v426, %v423
        %v481 = vpack.c.b16 %v427, %v424
        %v482 = vpack.c.b16 %v431, %v428
        %v483 = vpack.c.b16 %v432, %v429
        %v484 = vpack.c.b16 %v433, %v430
        %v485 = vpack.c.b16 %v437, %v434
        %v486 = vpack.c.b16 %v438, %v435
        %v487 = vpack.c.b16 %v439, %v436
        %v488 = vpack.c.b16 %v443, %v440
        %v489 = vpack.c.b16 %v444, %v441
        %v490 = vpack.c.b16 %v445, %v442
        %v491 = vpack.c.b16 %v449, %v446
        %v492 = vpack.c.b16 %v450, %v447
        %v493 = vpack.c.b16 %v451, %v448
        %v494 = vpack.c.b16 %v455, %v452
        %v495 = vpack.c.b16 %v456, %v453
        %v496 = vpack.c.b16 %v457, %v454
        %v497 = vpack.c.b16 %v461, %v458
        %v498 = vpack.c.b16 %v462, %v459
        %v499 = vpack.c.b16 %v463, %v460
        %v584 = vunpack.c.l.b16 %v296
        %v585 = vunpack.c.l.b16 %v297
        %v586 = vunpack.c.l.b16 %v298
        %v587 = vunpack.c.l.b16 %v299
        %v588 = vunpack.c.l.b16 %v300
        %v589 = vunpack.c.l.b16 %v301
        %v590 = vunpack.c.l.b16 %v302
        %v591 = vunpack.c.l.b16 %v303
        %v592 = vunpack.c.l.b16 %v304
        %v593 = vunpack.c.l.b16 %v305
        %v594 = vunpack.c.l.b16 %v306
        %v595 = vunpack.c.l.b16 %v307
        %v596 = vunpack.c.l.b16 %v308
        %v597 = vunpack.c.l.b16 %v309
        %v598 = vunpack.c.l.b16 %v310
        %v599 = vunpack.c.l.b16 %v311
        %v600 = vunpack.c.l.b16 %v312
        %v601 = vunpack.c.l.b16 %v313
        %v602 = vunpack.c.l.b16 %v314
        %v603 = vunpack.c.l.b16 %v315
        %v604 = vunpack.c.l.b16 %v316
        %v605 = vunpack.c.l.b16 %v317
        %v606 = vunpack.c.l.b16 %v318
        %v607 = vunpack.c.l.b16 %v319
        %v608 = vunpack.c.l.b16 %v320
        %v609 = vunpack.c.l.b16 %v321
        %v610 = vunpack.c.l.b16 %v322
        %v611 = vunpack.c.l.b16 %v323
        %v612 = vunpack.c.l.b16 %v324
        %v613 = vunpack.c.l.b16 %v325
        %v614 = vunpack.c.l.b16 %v326
        %v615 = vunpack.c.l.b16 %v327
        %v616 = vunpack.c.l.b16 %v328
        %v617 = vunpack.c.l.b16 %v329
        %v618 = vunpack.c.l.b16 %v330
        %v619 = vunpack.c.l.b16 %v331
        %v620 = vunpack.c.l.b16 %v332
        %v621 = vunpack.c.l.b16 %v333
        %v622 = vunpack.c.l.b16 %v334
        %v623 = vunpack.c.l.b16 %v335
        %v624 = vunpack.c.l.b16 %v336
        %v625 = vunpack.c.l.b16 %v337
        %v626 = vunpack.c.l.b16 %v338
        %v627 = vunpack.c.l.b16 %v339
        %v628 = vunpack.c.l.b16 %v340
        %v629 = vunpack.c.l.b16 %v341
        %v630 = vunpack.c.l.b16 %v342
        %v631 = vunpack.c.l.b16 %v343
        %v632 = vpack.c.b16 %v585, %v584
        %v633 = vpack.c.b16 %v587, %v586
        %v634 = vpack.c.b16 %v589, %v588
        %v635 = vpack.c.b16 %v591, %v590
        %v636 = vpack.c.b16 %v593, %v592
        %v637 = vpack.c.b16 %v595, %v594
        %v638 = vpack.c.b16 %v597, %v596
        %v639 = vpack.c.b16 %v599, %v598
        %v640 = vpack.c.b16 %v601, %v600
        %v641 = vpack.c.b16 %v603, %v602
        %v642 = vpack.c.b16 %v605, %v604
        %v643 = vpack.c.b16 %v607, %v606
        %v644 = vpack.c.b16 %v609, %v608
        %v645 = vpack.c.b16 %v611, %v610
        %v646 = vpack.c.b16 %v613, %v612
        %v647 = vpack.c.b16 %v615, %v614
        %v648 = vpack.c.b16 %v617, %v616
        %v649 = vpack.c.b16 %v619, %v618
        %v650 = vpack.c.b16 %v621, %v620
        %v651 = vpack.c.b16 %v623, %v622
        %v652 = vpack.c.b16 %v625, %v624
        %v653 = vpack.c.b16 %v627, %v626
        %v654 = vpack.c.b16 %v629, %v628
        %v655 = vpack.c.b16 %v631, %v630
        %680 = vmatprep.subr.bf16.mxu0 0
        %681 = vmatpush1.bf16.msra.mxu0 %v632
        %682 = vmatprep.subr.bf16.mxu0 0
        %683 = vmatpush1.bf16.msra.mxu0 %v633
        %684 = vmatprep.subr.bf16.mxu0 0
        %685 = vmatpush1.bf16.msra.mxu0 %v634
        %686 = vmatprep.subr.bf16.mxu0 0
        %687 = vmatpush1.bf16.msra.mxu0 %v635
        %688 = vmatprep.subr.bf16.mxu0 0
        %689 = vmatpush1.bf16.msra.mxu0 %v636
        %690 = vmatprep.subr.bf16.mxu0 0
        %691 = vmatpush1.bf16.msra.mxu0 %v637
        %692 = vmatprep.subr.bf16.mxu0 0
        %693 = vmatpush1.bf16.msra.mxu0 %v638
        %694 = vmatprep.subr.bf16.mxu0 0
        %695 = vmatpush1.bf16.msra.mxu0 %v639
        %696 = vmatprep.subr.bf16.mxu0 0
        %697 = vmatpush1.bf16.msra.mxu0 %v640
        %698 = vmatprep.subr.bf16.mxu0 0
        %699 = vmatpush1.bf16.msra.mxu0 %v641
        %700 = vmatprep.subr.bf16.mxu0 0
        %701 = vmatpush1.bf16.msra.mxu0 %v642
        %702 = vmatprep.subr.bf16.mxu0 0
        %703 = vmatpush1.bf16.msra.mxu0 %v643
        %704 = vmatprep.subr.bf16.mxu0 0
        %705 = vmatpush1.bf16.msra.mxu0 %v644
        %706 = vmatprep.subr.bf16.mxu0 0
        %707 = vmatpush1.bf16.msra.mxu0 %v645
        %708 = vmatprep.subr.bf16.mxu0 0
        %709 = vmatpush1.bf16.msra.mxu0 %v646
        %710 = vmatprep.subr.bf16.mxu0 0
        %711 = vmatpush1.bf16.msra.mxu0 %v647
        %712 = vmatprep.mubr.bf16.mxu0 %v465
        %713 = vmatmul.mubr.bf16.gmra.mrb[0].mxu0 %v464
        %v714 = vpop.f32.mrb[0].mxu0
        %v715 = vadd.f32 0.0, %v714
        %v716 = vpop.f32.mrb[0].mxu0
        %v717 = vpop.f32.mrb[0].mxu0
        %v718 = vadd.f32 0.0, %v717
        %v719 = vpop.f32.mrb[0].mxu0
        %720 = vmatprep.mubr.bf16.mxu0 %v468
        %721 = vmatmul.mubr.bf16.gmra.mrb[0].mxu0 %v467
        %v722 = vpop.f32.mrb[0].mxu0
        %v723 = vadd.f32 0.0, %v722
        %v724 = vpop.f32.mrb[0].mxu0
        %v725 = vpop.f32.mrb[0].mxu0
        %v726 = vadd.f32 0.0, %v725
        %v727 = vpop.f32.mrb[0].mxu0
        %728 = vmatprep.mubr.bf16.mxu0 %v471
        %729 = vmatmul.mubr.bf16.gmra.mrb[0].mxu0 %v470
        %v730 = vpop.f32.mrb[0].mxu0
        %v731 = vadd.f32 0.0, %v730
        %v732 = vpop.f32.mrb[0].mxu0
        %v733 = vpop.f32.mrb[0].mxu0
        %v734 = vadd.f32 0.0, %v733
        %v735 = vpop.f32.mrb[0].mxu0
        %736 = vmatprep.mubr.bf16.mxu0 %v474
        %737 = vmatmul.mubr.bf16.gmra.mrb[0].mxu0 %v473
        %v738 = vpop.f32.mrb[0].mxu0
        %v739 = vadd.f32 0.0, %v738
        %v740 = vpop.f32.mrb[0].mxu0
        %v741 = vpop.f32.mrb[0].mxu0
        %v742 = vadd.f32 0.0, %v741
        %v743 = vpop.f32.mrb[0].mxu0
        %744 = vmatprep.mubr.bf16.mxu0 %v477
        %745 = vmatmul.mubr.bf16.gmra.mrb[0].mxu0 %v476
        %v746 = vpop.f32.mrb[0].mxu0
        %v747 = vadd.f32 0.0, %v746
        %v748 = vpop.f32.mrb[0].mxu0
        %v749 = vpop.f32.mrb[0].mxu0
        %v750 = vadd.f32 0.0, %v749
        %v751 = vpop.f32.mrb[0].mxu0
        %752 = vmatprep.mubr.bf16.mxu0 %v480
        %753 = vmatmul.mubr.bf16.gmra.mrb[0].mxu0 %v479
        %v754 = vpop.f32.mrb[0].mxu0
        %v755 = vadd.f32 0.0, %v754
        %v756 = vpop.f32.mrb[0].mxu0
        %v757 = vpop.f32.mrb[0].mxu0
        %v758 = vadd.f32 0.0, %v757
        %v759 = vpop.f32.mrb[0].mxu0
        %760 = vmatprep.mubr.bf16.mxu0 %v483
        %761 = vmatmul.mubr.bf16.gmra.mrb[0].mxu0 %v482
        %v762 = vpop.f32.mrb[0].mxu0
        %v763 = vadd.f32 0.0, %v762
        %v764 = vpop.f32.mrb[0].mxu0
        %v765 = vpop.f32.mrb[0].mxu0
        %v766 = vadd.f32 0.0, %v765
        %v767 = vpop.f32.mrb[0].mxu0
        %768 = vmatprep.mubr.bf16.mxu0 %v486
        %769 = vmatmul.mubr.bf16.gmra.mrb[0].mxu0 %v485
        %v770 = vpop.f32.mrb[0].mxu0
        %v771 = vadd.f32 0.0, %v770
        %v772 = vpop.f32.mrb[0].mxu0
        %v773 = vpop.f32.mrb[0].mxu0
        %v774 = vadd.f32 0.0, %v773
        %v775 = vpop.f32.mrb[0].mxu0
        %776 = vmatprep.mubr.bf16.mxu0 %v489
        %777 = vmatmul.mubr.bf16.gmra.mrb[0].mxu0 %v488
        %v778 = vpop.f32.mrb[0].mxu0
        %v779 = vadd.f32 0.0, %v778
        %v780 = vpop.f32.mrb[0].mxu0
        %v781 = vpop.f32.mrb[0].mxu0
        %v782 = vadd.f32 0.0, %v781
        %v783 = vpop.f32.mrb[0].mxu0
        %784 = vmatprep.mubr.bf16.mxu0 %v492
        %785 = vmatmul.mubr.bf16.gmra.mrb[0].mxu0 %v491
        %v786 = vpop.f32.mrb[0].mxu0
        %v787 = vadd.f32 0.0, %v786
        %v788 = vpop.f32.mrb[0].mxu0
        %v789 = vpop.f32.mrb[0].mxu0
        %v790 = vadd.f32 0.0, %v789
        %v791 = vpop.f32.mrb[0].mxu0
        %792 = vmatprep.mubr.bf16.mxu0 %v495
        %793 = vmatmul.mubr.bf16.gmra.mrb[0].mxu0 %v494
        %v794 = vpop.f32.mrb[0].mxu0
        %v795 = vadd.f32 0.0, %v794
        %v796 = vpop.f32.mrb[0].mxu0
        %v797 = vpop.f32.mrb[0].mxu0
        %v798 = vadd.f32 0.0, %v797
        %v799 = vpop.f32.mrb[0].mxu0
        %800 = vmatprep.mubr.bf16.mxu0 %v498
        %801 = vmatmul.mubr.bf16.gmra.mrb[0].mxu0 %v497
        %v802 = vpop.f32.mrb[0].mxu0
        %v803 = vadd.f32 0.0, %v802
        %v804 = vpop.f32.mrb[0].mxu0
        %v805 = vpop.f32.mrb[0].mxu0
        %v806 = vadd.f32 0.0, %v805
        %v807 = vpop.f32.mrb[0].mxu0
        %808 = vdwg.mxu0
        %809 = vmatprep.subr.bf16.mxu0 0
        %810 = vmatpush1.bf16.msra.mxu0 %v648
        %811 = vmatprep.subr.bf16.mxu0 0
        %812 = vmatpush1.bf16.msra.mxu0 %v649
        %813 = vmatprep.subr.bf16.mxu0 0
        %814 = vmatpush1.bf16.msra.mxu0 %v650
        %815 = vmatprep.subr.bf16.mxu0 0
        %816 = vmatpush1.bf16.msra.mxu0 %v651
        %817 = vmatprep.subr.bf16.mxu0 0
        %818 = vmatpush1.bf16.msra.mxu0 %v652
        %819 = vmatprep.subr.bf16.mxu0 0
        %820 = vmatpush1.bf16.msra.mxu0 %v653
        %821 = vmatprep.subr.bf16.mxu0 0
        %822 = vmatpush1.bf16.msra.mxu0 %v654
        %823 = vmatprep.subr.bf16.mxu0 0
        %824 = vmatpush1.bf16.msra.mxu0 %v655
        %825 = vmatprep.subr.bf16.mxu0 0
        %826 = vmatpush1.bf16.msra.mxu0 0
        %827 = vmatprep.subr.bf16.mxu0 0
        %828 = vmatpush1.bf16.msra.mxu0 0
        %829 = vmatprep.subr.bf16.mxu0 0
        %830 = vmatpush1.bf16.msra.mxu0 0
        %831 = vmatprep.subr.bf16.mxu0 0
        %832 = vmatpush1.bf16.msra.mxu0 0
        %833 = vmatprep.subr.bf16.mxu0 0
        %834 = vmatpush1.bf16.msra.mxu0 0
        %835 = vmatprep.subr.bf16.mxu0 0
        %836 = vmatpush1.bf16.msra.mxu0 0
        %837 = vmatprep.subr.bf16.mxu0 0
        %838 = vmatpush1.bf16.msra.mxu0 0
        %839 = vmatprep.subr.bf16.mxu0 0
        %840 = vmatpush1.bf16.msra.mxu0 0
        %841 = vmatprep.mubr.bf16.mxu0 0
        %842 = vmatmul.mubr.bf16.gmra.mrb[0].mxu0 %v466
        %v843 = vpop.f32.mrb[0].mxu0
        %v844 = vadd.f32 %v715, %v843
        %v845 = vpop.f32.mrb[0].mxu0
        %v846 = vpop.f32.mrb[0].mxu0
        %v847 = vadd.f32 %v718, %v846
        %v848 = vpop.f32.mrb[0].mxu0
        %849 = vmatprep.mubr.bf16.mxu0 0
        %850 = vmatmul.mubr.bf16.gmra.mrb[0].mxu0 %v469
        %v851 = vpop.f32.mrb[0].mxu0
        %v852 = vadd.f32 %v723, %v851
        %v853 = vpop.f32.mrb[0].mxu0
        %v854 = vpop.f32.mrb[0].mxu0
        %v855 = vadd.f32 %v726, %v854
        %v856 = vpop.f32.mrb[0].mxu0
        %857 = vmatprep.mubr.bf16.mxu0 0
        %858 = vmatmul.mubr.bf16.gmra.mrb[0].mxu0 %v472
        %v859 = vpop.f32.mrb[0].mxu0
        %v860 = vadd.f32 %v731, %v859
        %v861 = vpop.f32.mrb[0].mxu0
        %v862 = vpop.f32.mrb[0].mxu0
        %v863 = vadd.f32 %v734, %v862
        %v864 = vpop.f32.mrb[0].mxu0
        %865 = vmatprep.mubr.bf16.mxu0 0
        %866 = vmatmul.mubr.bf16.gmra.mrb[0].mxu0 %v475
        %v867 = vpop.f32.mrb[0].mxu0
        %v868 = vadd.f32 %v739, %v867
        %v869 = vpop.f32.mrb[0].mxu0
        %v870 = vpop.f32.mrb[0].mxu0
        %v871 = vadd.f32 %v742, %v870
        %v872 = vpop.f32.mrb[0].mxu0
        %873 = vmatprep.mubr.bf16.mxu0 0
        %874 = vmatmul.mubr.bf16.gmra.mrb[0].mxu0 %v478
        %v875 = vpop.f32.mrb[0].mxu0
        %v876 = vadd.f32 %v747, %v875
        %v877 = vpop.f32.mrb[0].mxu0
        %v878 = vpop.f32.mrb[0].mxu0
        %v879 = vadd.f32 %v750, %v878
        %v880 = vpop.f32.mrb[0].mxu0
        %881 = vmatprep.mubr.bf16.mxu0 0
        %882 = vmatmul.mubr.bf16.gmra.mrb[0].mxu0 %v481
        %v883 = vpop.f32.mrb[0].mxu0
        %v884 = vadd.f32 %v755, %v883
        %v885 = vpop.f32.mrb[0].mxu0
        %v886 = vpop.f32.mrb[0].mxu0
        %v887 = vadd.f32 %v758, %v886
        %v888 = vpop.f32.mrb[0].mxu0
        %889 = vmatprep.mubr.bf16.mxu0 0
        %890 = vmatmul.mubr.bf16.gmra.mrb[0].mxu0 %v484
        %v891 = vpop.f32.mrb[0].mxu0
        %v892 = vadd.f32 %v763, %v891
        %v893 = vpop.f32.mrb[0].mxu0
        %v894 = vpop.f32.mrb[0].mxu0
        %v895 = vadd.f32 %v766, %v894
        %v896 = vpop.f32.mrb[0].mxu0
        %897 = vmatprep.mubr.bf16.mxu0 0
        %898 = vmatmul.mubr.bf16.gmra.mrb[0].mxu0 %v487
        %v899 = vpop.f32.mrb[0].mxu0
        %v900 = vadd.f32 %v771, %v899
        %v901 = vpop.f32.mrb[0].mxu0
        %v902 = vpop.f32.mrb[0].mxu0
        %v903 = vadd.f32 %v774, %v902
        %v904 = vpop.f32.mrb[0].mxu0
        %905 = vmatprep.mubr.bf16.mxu0 0
        %906 = vmatmul.mubr.bf16.gmra.mrb[0].mxu0 %v490
        %v907 = vpop.f32.mrb[0].mxu0
        %v908 = vadd.f32 %v779, %v907
        %v909 = vpop.f32.mrb[0].mxu0
        %v910 = vpop.f32.mrb[0].mxu0
        %v911 = vadd.f32 %v782, %v910
        %v912 = vpop.f32.mrb[0].mxu0
        %913 = vmatprep.mubr.bf16.mxu0 0
        %914 = vmatmul.mubr.bf16.gmra.mrb[0].mxu0 %v493
        %v915 = vpop.f32.mrb[0].mxu0
        %v916 = vadd.f32 %v787, %v915
        %v917 = vpop.f32.mrb[0].mxu0
        %v918 = vpop.f32.mrb[0].mxu0
        %v919 = vadd.f32 %v790, %v918
        %v920 = vpop.f32.mrb[0].mxu0
        %921 = vmatprep.mubr.bf16.mxu0 0
        %922 = vmatmul.mubr.bf16.gmra.mrb[0].mxu0 %v496
        %v923 = vpop.f32.mrb[0].mxu0
        %v924 = vadd.f32 %v795, %v923
        %v925 = vpop.f32.mrb[0].mxu0
        %v926 = vpop.f32.mrb[0].mxu0
        %v927 = vadd.f32 %v798, %v926
        %v928 = vpop.f32.mrb[0].mxu0
        %929 = vmatprep.mubr.bf16.mxu0 0
        %930 = vmatmul.mubr.bf16.gmra.mrb[0].mxu0 %v499
        %v931 = vpop.f32.mrb[0].mxu0
        %v932 = vadd.f32 %v803, %v931
        %v933 = vpop.f32.mrb[0].mxu0
        %v934 = vpop.f32.mrb[0].mxu0
        %v935 = vadd.f32 %v806, %v934
        %v936 = vpop.f32.mrb[0].mxu0
        %937 = vdwg.mxu0
        %p938 = scmp.eq.s32.totalorder %s26, 0
        // Predicated region
        $region45: #{tpu_custom_call.1} parent=31 // pred_check
          %p939 = pneg %p938
        $region46: #{tpu_custom_call.1} parent=31 // pred_check_branch
          %941 = sbr.rel (%p939) target = $region48
        $region47: #{tpu_custom_call.1} parent=31 // pred_region
          %942 = vst [vmem:[#allocation2] sm:$0xff] %v844
          %943 = vst [vmem:[#allocation2 + $0x8] sm:$0xff] %v847
          %944 = vst [vmem:[#allocation2 + $0x10] sm:$0xff] %v852
          %945 = vst [vmem:[#allocation2 + $0x18] sm:$0xff] %v855
          %946 = vst [vmem:[#allocation2 + $0x20] sm:$0xff] %v860
          %947 = vst [vmem:[#allocation2 + $0x28] sm:$0xff] %v863
          %948 = vst [vmem:[#allocation2 + $0x30] sm:$0xff] %v868
          %949 = vst [vmem:[#allocation2 + $0x38] sm:$0xff] %v871
          %950 = vst [vmem:[#allocation2 + $0x40] sm:$0xff] %v876
          %951 = vst [vmem:[#allocation2 + $0x48] sm:$0xff] %v879
          %952 = vst [vmem:[#allocation2 + $0x50] sm:$0xff] %v884
          %953 = vst [vmem:[#allocation2 + $0x58] sm:$0xff] %v887
          %954 = vst [vmem:[#allocation2 + $0x60] sm:$0xff] %v892
          %955 = vst [vmem:[#allocation2 + $0x68] sm:$0xff] %v895
          %956 = vst [vmem:[#allocation2 + $0x70] sm:$0xff] %v900
          %957 = vst [vmem:[#allocation2 + $0x78] sm:$0xff] %v903
          %958 = vst [vmem:[#allocation2 + $0x80] sm:$0xff] %v908
          %959 = vst [vmem:[#allocation2 + $0x88] sm:$0xff] %v911
          %960 = vst [vmem:[#allocation2 + $0x90] sm:$0xff] %v916
          %961 = vst [vmem:[#allocation2 + $0x98] sm:$0xff] %v919
          %962 = vst [vmem:[#allocation2 + $0xa0] sm:$0xff] %v924
          %963 = vst [vmem:[#allocation2 + $0xa8] sm:$0xff] %v927
          %964 = vst [vmem:[#allocation2 + $0xb0] sm:$0xff] %v932
          %965 = vst [vmem:[#allocation2 + $0xb8] sm:$0xff] %v935
        $region48: #{tpu_custom_call.1} parent=31 // pred_fallthru
          _
        %p966 = scmp.gt.s32.totalorder %s26, 0
        // Predicated region
        $region49: #{tpu_custom_call.1} parent=31 // pred_check
          %p967 = pneg %p966
        $region50: #{tpu_custom_call.1} parent=31 // pred_check_branch
          %969 = sbr.rel (%p967) target = $region52
        $region51: #{tpu_custom_call.1} parent=31 // pred_region
          %v970 = vld [vmem:[#allocation2] sm:$0xff]
          %v971 = vld [vmem:[#allocation2 + $0x8] sm:$0xff]
          %v972 = vld [vmem:[#allocation2 + $0x10] sm:$0xff]
          %v973 = vld [vmem:[#allocation2 + $0x18] sm:$0xff]
          %v974 = vld [vmem:[#allocation2 + $0x20] sm:$0xff]
          %v975 = vld [vmem:[#allocation2 + $0x28] sm:$0xff]
          %v976 = vld [vmem:[#allocation2 + $0x30] sm:$0xff]
          %v977 = vld [vmem:[#allocation2 + $0x38] sm:$0xff]
          %v978 = vld [vmem:[#allocation2 + $0x40] sm:$0xff]
          %v979 = vld [vmem:[#allocation2 + $0x48] sm:$0xff]
          %v980 = vld [vmem:[#allocation2 + $0x50] sm:$0xff]
          %v981 = vld [vmem:[#allocation2 + $0x58] sm:$0xff]
          %v982 = vld [vmem:[#allocation2 + $0x60] sm:$0xff]
          %v983 = vld [vmem:[#allocation2 + $0x68] sm:$0xff]
          %v984 = vld [vmem:[#allocation2 + $0x70] sm:$0xff]
          %v985 = vld [vmem:[#allocation2 + $0x78] sm:$0xff]
          %v986 = vld [vmem:[#allocation2 + $0x80] sm:$0xff]
          %v987 = vld [vmem:[#allocation2 + $0x88] sm:$0xff]
          %v988 = vld [vmem:[#allocation2 + $0x90] sm:$0xff]
          %v989 = vld [vmem:[#allocation2 + $0x98] sm:$0xff]
          %v990 = vld [vmem:[#allocation2 + $0xa0] sm:$0xff]
          %v991 = vld [vmem:[#allocation2 + $0xa8] sm:$0xff]
          %v992 = vld [vmem:[#allocation2 + $0xb0] sm:$0xff]
          %v993 = vld [vmem:[#allocation2 + $0xb8] sm:$0xff]
          %v994 = vadd.f32 %v970, %v844
          %v995 = vadd.f32 %v971, %v847
          %v996 = vadd.f32 %v972, %v852
          %v997 = vadd.f32 %v973, %v855
          %v998 = vadd.f32 %v974, %v860
          %v999 = vadd.f32 %v975, %v863
          %v1000 = vadd.f32 %v976, %v868
          %v1001 = vadd.f32 %v977, %v871
          %v1002 = vadd.f32 %v978, %v876
          %v1003 = vadd.f32 %v979, %v879
          %v1004 = vadd.f32 %v980, %v884
          %v1005 = vadd.f32 %v981, %v887
          %v1006 = vadd.f32 %v982, %v892
          %v1007 = vadd.f32 %v983, %v895
          %v1008 = vadd.f32 %v984, %v900
          %v1009 = vadd.f32 %v985, %v903
          %v1010 = vadd.f32 %v986, %v908
          %v1011 = vadd.f32 %v987, %v911
          %v1012 = vadd.f32 %v988, %v916
          %v1013 = vadd.f32 %v989, %v919
          %v1014 = vadd.f32 %v990, %v924
          %v1015 = vadd.f32 %v991, %v927
          %v1016 = vadd.f32 %v992, %v932
          %v1017 = vadd.f32 %v993, %v935
          %1018 = vst [vmem:[#allocation2] sm:$0xff] %v994
          %1019 = vst [vmem:[#allocation2 + $0x8] sm:$0xff] %v995
          %1020 = vst [vmem:[#allocation2 + $0x10] sm:$0xff] %v996
          %1021 = vst [vmem:[#allocation2 + $0x18] sm:$0xff] %v997
          %1022 = vst [vmem:[#allocation2 + $0x20] sm:$0xff] %v998
          %1023 = vst [vmem:[#allocation2 + $0x28] sm:$0xff] %v999
          %1024 = vst [vmem:[#allocation2 + $0x30] sm:$0xff] %v1000
          %1025 = vst [vmem:[#allocation2 + $0x38] sm:$0xff] %v1001
          %1026 = vst [vmem:[#allocation2 + $0x40] sm:$0xff] %v1002
          %1027 = vst [vmem:[#allocation2 + $0x48] sm:$0xff] %v1003
          %1028 = vst [vmem:[#allocation2 + $0x50] sm:$0xff] %v1004
          %1029 = vst [vmem:[#allocation2 + $0x58] sm:$0xff] %v1005
          %1030 = vst [vmem:[#allocation2 + $0x60] sm:$0xff] %v1006
          %1031 = vst [vmem:[#allocation2 + $0x68] sm:$0xff] %v1007
          %1032 = vst [vmem:[#allocation2 + $0x70] sm:$0xff] %v1008
          %1033 = vst [vmem:[#allocation2 + $0x78] sm:$0xff] %v1009
          %1034 = vst [vmem:[#allocation2 + $0x80] sm:$0xff] %v1010
          %1035 = vst [vmem:[#allocation2 + $0x88] sm:$0xff] %v1011
          %1036 = vst [vmem:[#allocation2 + $0x90] sm:$0xff] %v1012
          %1037 = vst [vmem:[#allocation2 + $0x98] sm:$0xff] %v1013
          %1038 = vst [vmem:[#allocation2 + $0xa0] sm:$0xff] %v1014
          %1039 = vst [vmem:[#allocation2 + $0xa8] sm:$0xff] %v1015
          %1040 = vst [vmem:[#allocation2 + $0xb0] sm:$0xff] %v1016
          %1041 = vst [vmem:[#allocation2 + $0xb8] sm:$0xff] %v1017
        $region52: #{tpu_custom_call.1} parent=31 // pred_fallthru
          _
        // Predicated region
        $region53: #{tpu_custom_call.1} parent=31 // pred_check
          %p1042 = pneg %p938
        $region54: #{tpu_custom_call.1} parent=31 // pred_check_branch
          %1044 = sbr.rel (%p1042) target = $region56
        $region55: #{tpu_custom_call.1} parent=31 // pred_region
          %v1045 = vld [vmem:[#allocation2] sm:$0xff]
          %v1046 = vld [vmem:[#allocation2 + $0x8] sm:$0xff]
          %v1047 = vld [vmem:[#allocation2 + $0x10] sm:$0xff]
          %v1048 = vld [vmem:[#allocation2 + $0x18] sm:$0xff]
          %v1049 = vld [vmem:[#allocation2 + $0x20] sm:$0xff]
          %v1050 = vld [vmem:[#allocation2 + $0x28] sm:$0xff]
          %v1051 = vld [vmem:[#allocation2 + $0x30] sm:$0xff]
          %v1052 = vld [vmem:[#allocation2 + $0x38] sm:$0xff]
          %v1053 = vld [vmem:[#allocation2 + $0x40] sm:$0xff]
          %v1054 = vld [vmem:[#allocation2 + $0x48] sm:$0xff]
          %v1055 = vld [vmem:[#allocation2 + $0x50] sm:$0xff]
          %v1056 = vld [vmem:[#allocation2 + $0x58] sm:$0xff]
          %v1057 = vld [vmem:[#allocation2 + $0x60] sm:$0xff]
          %v1058 = vld [vmem:[#allocation2 + $0x68] sm:$0xff]
          %v1059 = vld [vmem:[#allocation2 + $0x70] sm:$0xff]
          %v1060 = vld [vmem:[#allocation2 + $0x78] sm:$0xff]
          %v1061 = vld [vmem:[#allocation2 + $0x80] sm:$0xff]
          %v1062 = vld [vmem:[#allocation2 + $0x88] sm:$0xff]
          %v1063 = vld [vmem:[#allocation2 + $0x90] sm:$0xff]
          %v1064 = vld [vmem:[#allocation2 + $0x98] sm:$0xff]
          %v1065 = vld [vmem:[#allocation2 + $0xa0] sm:$0xff]
          %v1066 = vld [vmem:[#allocation2 + $0xa8] sm:$0xff]
          %v1067 = vld [vmem:[#allocation2 + $0xb0] sm:$0xff]
          %v1068 = vld [vmem:[#allocation2 + $0xb8] sm:$0xff]
          %v1069 = vld [vmem:[#allocation8] sm:$0xff]
          %v1070 = vld [vmem:[#allocation8 + $0x8] sm:$0xff]
          %v1071 = vld [vmem:[#allocation8 + $0x10] sm:$0xff]
          %v1072 = vld [vmem:[#allocation8 + $0x18] sm:$0xff]
          %v1073 = vld [vmem:[#allocation8 + $0x20] sm:$0xff]
          %v1074 = vld [vmem:[#allocation8 + $0x28] sm:$0xff]
          %v1075 = vld [vmem:[#allocation8 + $0x30] sm:$0xff]
          %v1076 = vld [vmem:[#allocation8 + $0x38] sm:$0xff]
          %v1077 = vld [vmem:[#allocation8 + $0x40] sm:$0xff]
          %v1078 = vld [vmem:[#allocation8 + $0x48] sm:$0xff]
          %v1079 = vld [vmem:[#allocation8 + $0x50] sm:$0xff]
          %v1080 = vld [vmem:[#allocation8 + $0x58] sm:$0xff]
          %v1081 = vld [vmem:[#allocation8 + $0x60] sm:$0xff]
          %v1082 = vld [vmem:[#allocation8 + $0x68] sm:$0xff]
          %v1083 = vld [vmem:[#allocation8 + $0x70] sm:$0xff]
          %v1084 = vld [vmem:[#allocation8 + $0x78] sm:$0xff]
          %v1085 = vunpack.c.l.bf16 %v1069
          %v1086 = vunpack.c.h.bf16 %v1069
          %v1087 = vunpack.c.l.bf16 %v1070
          %v1088 = vunpack.c.h.bf16 %v1070
          %v1089 = vunpack.c.l.bf16 %v1071
          %v1090 = vunpack.c.h.bf16 %v1071
          %v1091 = vunpack.c.l.bf16 %v1072
          %v1092 = vunpack.c.h.bf16 %v1072
          %v1093 = vunpack.c.l.bf16 %v1073
          %v1094 = vunpack.c.h.bf16 %v1073
          %v1095 = vunpack.c.l.bf16 %v1074
          %v1096 = vunpack.c.h.bf16 %v1074
          %v1097 = vunpack.c.l.bf16 %v1075
          %v1098 = vunpack.c.h.bf16 %v1075
          %v1099 = vunpack.c.l.bf16 %v1076
          %v1100 = vunpack.c.h.bf16 %v1076
          %v1101 = vunpack.c.l.bf16 %v1077
          %v1102 = vunpack.c.h.bf16 %v1077
          %v1103 = vunpack.c.l.bf16 %v1078
          %v1104 = vunpack.c.h.bf16 %v1078
          %v1105 = vunpack.c.l.bf16 %v1079
          %v1106 = vunpack.c.h.bf16 %v1079
          %v1107 = vunpack.c.l.bf16 %v1080
          %v1108 = vunpack.c.h.bf16 %v1080
          %v1109 = vunpack.c.l.bf16 %v1081
          %v1110 = vunpack.c.h.bf16 %v1081
          %v1111 = vunpack.c.l.bf16 %v1082
          %v1112 = vunpack.c.h.bf16 %v1082
          %v1113 = vunpack.c.l.bf16 %v1083
          %v1114 = vunpack.c.h.bf16 %v1083
          %v1115 = vunpack.c.l.bf16 %v1084
          %v1116 = vunpack.c.h.bf16 %v1084
          %1117 = vmatprep.subr.mxu0 %v1086
          %1118 = vmatpush1.msra.mxu0 %v1085
          %1119 = vmatprep.subr.mxu0 %v1088
          %1120 = vmatpush1.msra.mxu0 %v1087
          %1121 = vmatprep.subr.mxu0 %v1090
          %1122 = vmatpush1.msra.mxu0 %v1089
          %1123 = vmatprep.subr.mxu0 %v1092
          %1124 = vmatpush1.msra.mxu0 %v1091
          %1125 = vmatprep.subr.mxu0 %v1094
          %1126 = vmatpush1.msra.mxu0 %v1093
          %1127 = vmatprep.subr.mxu0 %v1096
          %1128 = vmatpush1.msra.mxu0 %v1095
          %1129 = vmatprep.subr.mxu0 %v1098
          %1130 = vmatpush1.msra.mxu0 %v1097
          %1131 = vmatprep.subr.mxu0 %v1100
          %1132 = vmatpush1.msra.mxu0 %v1099
          %1133 = vmatprep.subr.mxu0 %v1102
          %1134 = vmatpush1.msra.mxu0 %v1101
          %1135 = vmatprep.subr.mxu0 %v1104
          %1136 = vmatpush1.msra.mxu0 %v1103
          %1137 = vmatprep.subr.mxu0 %v1106
          %1138 = vmatpush1.msra.mxu0 %v1105
          %1139 = vmatprep.subr.mxu0 %v1108
          %1140 = vmatpush1.msra.mxu0 %v1107
          %1141 = vmatprep.subr.mxu0 %v1110
          %1142 = vmatpush1.msra.mxu0 %v1109
          %1143 = vmatprep.subr.mxu0 %v1112
          %1144 = vmatpush1.msra.mxu0 %v1111
          %1145 = vmatprep.subr.mxu0 %v1114
          %1146 = vmatpush1.msra.mxu0 %v1113
          %1147 = vmatprep.subr.mxu0 %v1116
          %1148 = vmatpush1.msra.mxu0 %v1115
          %1149 = vmatprep.subr.mxu0 0.0
          %1150 = vmatpush1.msra.mxu0 0.0
          %1151 = vmatprep.subr.mxu0 0.0
          %1152 = vmatpush1.msra.mxu0 0.0
          %1153 = vmatprep.subr.mxu0 0.0
          %1154 = vmatpush1.msra.mxu0 0.0
          %1155 = vmatprep.subr.mxu0 0.0
          %1156 = vmatpush1.msra.mxu0 0.0
          %1157 = vmatprep.subr.mxu0 0.0
          %1158 = vmatpush1.msra.mxu0 0.0
          %1159 = vmatprep.subr.mxu0 0.0
          %1160 = vmatpush1.msra.mxu0 0.0
          %1161 = vmatprep.subr.mxu0 0.0
          %1162 = vmatpush1.msra.mxu0 0.0
          %1163 = vmatprep.subr.mxu0 0.0
          %1164 = vmatpush1.msra.mxu0 0.0
          %1165 = vmatprep.subr.mxu0 0.0
          %1166 = vmatpush1.msra.mxu0 0.0
          %1167 = vmatprep.subr.mxu0 0.0
          %1168 = vmatpush1.msra.mxu0 0.0
          %1169 = vmatprep.subr.mxu0 0.0
          %1170 = vmatpush1.msra.mxu0 0.0
          %1171 = vmatprep.subr.mxu0 0.0
          %1172 = vmatpush1.msra.mxu0 0.0
          %1173 = vmatprep.subr.mxu0 0.0
          %1174 = vmatpush1.msra.mxu0 0.0
          %1175 = vmatprep.subr.mxu0 0.0
          %1176 = vmatpush1.msra.mxu0 0.0
          %1177 = vmatprep.subr.mxu0 0.0
          %1178 = vmatpush1.msra.mxu0 0.0
          %1179 = vmatprep.subr.mxu0 0.0
          %1180 = vmatpush1.msra.mxu0 0.0
          %1181 = vmatprep.mubr.f32.mxu0 0.0
          %1182 = vmatmul.mubr.f32.gmra.mrb[0].mxu0 %v1045
          %v1183 = vpop.f32.mrb[0].mxu0
          %v1184 = vadd.f32 0.0, %v1183
          %v1185 = vpop.f32.mrb[0].mxu0
          %v1186 = vadd.f32 0.0, %v1185
          %1187 = vmatprep.mubr.f32.mxu0 0.0
          %1188 = vmatmul.mubr.f32.gmra.mrb[0].mxu0 %v1046
          %v1189 = vpop.f32.mrb[0].mxu0
          %v1190 = vadd.f32 0.0, %v1189
          %v1191 = vpop.f32.mrb[0].mxu0
          %v1192 = vadd.f32 0.0, %v1191
          %1193 = vmatprep.mubr.f32.mxu0 0.0
          %1194 = vmatmul.mubr.f32.gmra.mrb[0].mxu0 %v1047
          %v1195 = vpop.f32.mrb[0].mxu0
          %v1196 = vadd.f32 0.0, %v1195
          %v1197 = vpop.f32.mrb[0].mxu0
          %v1198 = vadd.f32 0.0, %v1197
          %1199 = vmatprep.mubr.f32.mxu0 0.0
          %1200 = vmatmul.mubr.f32.gmra.mrb[0].mxu0 %v1048
          %v1201 = vpop.f32.mrb[0].mxu0
          %v1202 = vadd.f32 0.0, %v1201
          %v1203 = vpop.f32.mrb[0].mxu0
          %v1204 = vadd.f32 0.0, %v1203
          %1205 = vmatprep.mubr.f32.mxu0 0.0
          %1206 = vmatmul.mubr.f32.gmra.mrb[0].mxu0 %v1049
          %v1207 = vpop.f32.mrb[0].mxu0
          %v1208 = vadd.f32 0.0, %v1207
          %v1209 = vpop.f32.mrb[0].mxu0
          %v1210 = vadd.f32 0.0, %v1209
          %1211 = vmatprep.mubr.f32.mxu0 0.0
          %1212 = vmatmul.mubr.f32.gmra.mrb[0].mxu0 %v1050
          %v1213 = vpop.f32.mrb[0].mxu0
          %v1214 = vadd.f32 0.0, %v1213
          %v1215 = vpop.f32.mrb[0].mxu0
          %v1216 = vadd.f32 0.0, %v1215
          %1217 = vmatprep.mubr.f32.mxu0 0.0
          %1218 = vmatmul.mubr.f32.gmra.mrb[0].mxu0 %v1051
          %v1219 = vpop.f32.mrb[0].mxu0
          %v1220 = vadd.f32 0.0, %v1219
          %v1221 = vpop.f32.mrb[0].mxu0
          %v1222 = vadd.f32 0.0, %v1221
          %1223 = vmatprep.mubr.f32.mxu0 0.0
          %1224 = vmatmul.mubr.f32.gmra.mrb[0].mxu0 %v1052
          %v1225 = vpop.f32.mrb[0].mxu0
          %v1226 = vadd.f32 0.0, %v1225
          %v1227 = vpop.f32.mrb[0].mxu0
          %v1228 = vadd.f32 0.0, %v1227
          %1229 = vmatprep.mubr.f32.mxu0 0.0
          %1230 = vmatmul.mubr.f32.gmra.mrb[0].mxu0 %v1053
          %v1231 = vpop.f32.mrb[0].mxu0
          %v1232 = vadd.f32 0.0, %v1231
          %v1233 = vpop.f32.mrb[0].mxu0
          %v1234 = vadd.f32 0.0, %v1233
          %1235 = vmatprep.mubr.f32.mxu0 0.0
          %1236 = vmatmul.mubr.f32.gmra.mrb[0].mxu0 %v1054
          %v1237 = vpop.f32.mrb[0].mxu0
          %v1238 = vadd.f32 0.0, %v1237
          %v1239 = vpop.f32.mrb[0].mxu0
          %v1240 = vadd.f32 0.0, %v1239
          %1241 = vmatprep.mubr.f32.mxu0 0.0
          %1242 = vmatmul.mubr.f32.gmra.mrb[0].mxu0 %v1055
          %v1243 = vpop.f32.mrb[0].mxu0
          %v1244 = vadd.f32 0.0, %v1243
          %v1245 = vpop.f32.mrb[0].mxu0
          %v1246 = vadd.f32 0.0, %v1245
          %1247 = vmatprep.mubr.f32.mxu0 0.0
          %1248 = vmatmul.mubr.f32.gmra.mrb[0].mxu0 %v1056
          %v1249 = vpop.f32.mrb[0].mxu0
          %v1250 = vadd.f32 0.0, %v1249
          %v1251 = vpop.f32.mrb[0].mxu0
          %v1252 = vadd.f32 0.0, %v1251
          %1253 = vmatprep.mubr.f32.mxu0 0.0
          %1254 = vmatmul.mubr.f32.gmra.mrb[0].mxu0 %v1057
          %v1255 = vpop.f32.mrb[0].mxu0
          %v1256 = vadd.f32 0.0, %v1255
          %v1257 = vpop.f32.mrb[0].mxu0
          %v1258 = vadd.f32 0.0, %v1257
          %1259 = vmatprep.mubr.f32.mxu0 0.0
          %1260 = vmatmul.mubr.f32.gmra.mrb[0].mxu0 %v1058
          %v1261 = vpop.f32.mrb[0].mxu0
          %v1262 = vadd.f32 0.0, %v1261
          %v1263 = vpop.f32.mrb[0].mxu0
          %v1264 = vadd.f32 0.0, %v1263
          %1265 = vmatprep.mubr.f32.mxu0 0.0
          %1266 = vmatmul.mubr.f32.gmra.mrb[0].mxu0 %v1059
          %v1267 = vpop.f32.mrb[0].mxu0
          %v1268 = vadd.f32 0.0, %v1267
          %v1269 = vpop.f32.mrb[0].mxu0
          %v1270 = vadd.f32 0.0, %v1269
          %1271 = vmatprep.mubr.f32.mxu0 0.0
          %1272 = vmatmul.mubr.f32.gmra.mrb[0].mxu0 %v1060
          %v1273 = vpop.f32.mrb[0].mxu0
          %v1274 = vadd.f32 0.0, %v1273
          %v1275 = vpop.f32.mrb[0].mxu0
          %v1276 = vadd.f32 0.0, %v1275
          %1277 = vmatprep.mubr.f32.mxu0 0.0
          %1278 = vmatmul.mubr.f32.gmra.mrb[0].mxu0 %v1061
          %v1279 = vpop.f32.mrb[0].mxu0
          %v1280 = vadd.f32 0.0, %v1279
          %v1281 = vpop.f32.mrb[0].mxu0
          %v1282 = vadd.f32 0.0, %v1281
          %1283 = vmatprep.mubr.f32.mxu0 0.0
          %1284 = vmatmul.mubr.f32.gmra.mrb[0].mxu0 %v1062
          %v1285 = vpop.f32.mrb[0].mxu0
          %v1286 = vadd.f32 0.0, %v1285
          %v1287 = vpop.f32.mrb[0].mxu0
          %v1288 = vadd.f32 0.0, %v1287
          %1289 = vmatprep.mubr.f32.mxu0 0.0
          %1290 = vmatmul.mubr.f32.gmra.mrb[0].mxu0 %v1063
          %v1291 = vpop.f32.mrb[0].mxu0
          %v1292 = vadd.f32 0.0, %v1291
          %v1293 = vpop.f32.mrb[0].mxu0
          %v1294 = vadd.f32 0.0, %v1293
          %1295 = vmatprep.mubr.f32.mxu0 0.0
          %1296 = vmatmul.mubr.f32.gmra.mrb[0].mxu0 %v1064
          %v1297 = vpop.f32.mrb[0].mxu0
          %v1298 = vadd.f32 0.0, %v1297
          %v1299 = vpop.f32.mrb[0].mxu0
          %v1300 = vadd.f32 0.0, %v1299
          %1301 = vmatprep.mubr.f32.mxu0 0.0
          %1302 = vmatmul.mubr.f32.gmra.mrb[0].mxu0 %v1065
          %v1303 = vpop.f32.mrb[0].mxu0
          %v1304 = vadd.f32 0.0, %v1303
          %v1305 = vpop.f32.mrb[0].mxu0
          %v1306 = vadd.f32 0.0, %v1305
          %1307 = vmatprep.mubr.f32.mxu0 0.0
          %1308 = vmatmul.mubr.f32.gmra.mrb[0].mxu0 %v1066
          %v1309 = vpop.f32.mrb[0].mxu0
          %v1310 = vadd.f32 0.0, %v1309
          %v1311 = vpop.f32.mrb[0].mxu0
          %v1312 = vadd.f32 0.0, %v1311
          %1313 = vmatprep.mubr.f32.mxu0 0.0
          %1314 = vmatmul.mubr.f32.gmra.mrb[0].mxu0 %v1067
          %v1315 = vpop.f32.mrb[0].mxu0
          %v1316 = vadd.f32 0.0, %v1315
          %v1317 = vpop.f32.mrb[0].mxu0
          %v1318 = vadd.f32 0.0, %v1317
          %1319 = vmatprep.mubr.f32.mxu0 0.0
          %1320 = vmatmul.mubr.f32.gmra.mrb[0].mxu0 %v1068
          %v1321 = vpop.f32.mrb[0].mxu0
          %v1322 = vadd.f32 0.0, %v1321
          %v1323 = vpop.f32.mrb[0].mxu0
          %v1324 = vadd.f32 0.0, %v1323
          %1325 = vdwg.mxu0
          %v1326 = vmax.f32 %v1184, 0.0
          %v1327 = vmax.f32 %v1186, 0.0
          %v1328 = vmax.f32 %v1190, 0.0
          %v1329 = vmax.f32 %v1192, 0.0
          %v1330 = vmax.f32 %v1196, 0.0
          %v1331 = vmax.f32 %v1198, 0.0
          %v1332 = vmax.f32 %v1202, 0.0
          %v1333 = vmax.f32 %v1204, 0.0
          %v1334 = vmax.f32 %v1208, 0.0
          %v1335 = vmax.f32 %v1210, 0.0
          %v1336 = vmax.f32 %v1214, 0.0
          %v1337 = vmax.f32 %v1216, 0.0
          %v1338 = vmax.f32 %v1220, 0.0
          %v1339 = vmax.f32 %v1222, 0.0
          %v1340 = vmax.f32 %v1226, 0.0
          %v1341 = vmax.f32 %v1228, 0.0
          %v1342 = vmax.f32 %v1232, 0.0
          %v1343 = vmax.f32 %v1234, 0.0
          %v1344 = vmax.f32 %v1238, 0.0
          %v1345 = vmax.f32 %v1240, 0.0
          %v1346 = vmax.f32 %v1244, 0.0
          %v1347 = vmax.f32 %v1246, 0.0
          %v1348 = vmax.f32 %v1250, 0.0
          %v1349 = vmax.f32 %v1252, 0.0
          %v1350 = vmax.f32 %v1256, 0.0
          %v1351 = vmax.f32 %v1258, 0.0
          %v1352 = vmax.f32 %v1262, 0.0
          %v1353 = vmax.f32 %v1264, 0.0
          %v1354 = vmax.f32 %v1268, 0.0
          %v1355 = vmax.f32 %v1270, 0.0
          %v1356 = vmax.f32 %v1274, 0.0
          %v1357 = vmax.f32 %v1276, 0.0
          %v1358 = vmax.f32 %v1280, 0.0
          %v1359 = vmax.f32 %v1282, 0.0
          %v1360 = vmax.f32 %v1286, 0.0
          %v1361 = vmax.f32 %v1288, 0.0
          %v1362 = vmax.f32 %v1292, 0.0
          %v1363 = vmax.f32 %v1294, 0.0
          %v1364 = vmax.f32 %v1298, 0.0
          %v1365 = vmax.f32 %v1300, 0.0
          %v1366 = vmax.f32 %v1304, 0.0
          %v1367 = vmax.f32 %v1306, 0.0
          %v1368 = vmax.f32 %v1310, 0.0
          %v1369 = vmax.f32 %v1312, 0.0
          %v1370 = vmax.f32 %v1316, 0.0
          %v1371 = vmax.f32 %v1318, 0.0
          %v1372 = vmax.f32 %v1322, 0.0
          %v1373 = vmax.f32 %v1324, 0.0
          %1374 = vst [vmem:[%s242] sm:$0xff] %v1326
          %1375 = vst [vmem:[%s242 + $0x8] sm:$0xff] %v1327
          %1376 = vst [vmem:[%s242 + $0x10] sm:$0xff] %v1328
          %1377 = vst [vmem:[%s242 + $0x18] sm:$0xff] %v1329
          %1378 = vst [vmem:[%s242 + $0x20] sm:$0xff] %v1330
          %1379 = vst [vmem:[%s242 + $0x28] sm:$0xff] %v1331
          %1380 = vst [vmem:[%s242 + $0x30] sm:$0xff] %v1332
          %1381 = vst [vmem:[%s242 + $0x38] sm:$0xff] %v1333
          %1382 = vst [vmem:[%s242 + $0x40] sm:$0xff] %v1334
          %1383 = vst [vmem:[%s242 + $0x48] sm:$0xff] %v1335
          %1384 = vst [vmem:[%s242 + $0x50] sm:$0xff] %v1336
          %1385 = vst [vmem:[%s242 + $0x58] sm:$0xff] %v1337
          %1386 = vst [vmem:[%s242 + $0x60] sm:$0xff] %v1338
          %1387 = vst [vmem:[%s242 + $0x68] sm:$0xff] %v1339
          %1388 = vst [vmem:[%s242 + $0x70] sm:$0xff] %v1340
          %1389 = vst [vmem:[%s242 + $0x78] sm:$0xff] %v1341
          %1390 = vst [vmem:[%s242 + $0x80] sm:$0xff] %v1342
          %1391 = vst [vmem:[%s242 + $0x88] sm:$0xff] %v1343
          %1392 = vst [vmem:[%s242 + $0x90] sm:$0xff] %v1344
          %1393 = vst [vmem:[%s242 + $0x98] sm:$0xff] %v1345
          %1394 = vst [vmem:[%s242 + $0xa0] sm:$0xff] %v1346
          %1395 = vst [vmem:[%s242 + $0xa8] sm:$0xff] %v1347
          %1396 = vst [vmem:[%s242 + $0xb0] sm:$0xff] %v1348
          %1397 = vst [vmem:[%s242 + $0xb8] sm:$0xff] %v1349
          %1398 = vst [vmem:[%s242 + $0xc0] sm:$0xff] %v1350
          %1399 = vst [vmem:[%s242 + $0xc8] sm:$0xff] %v1351
          %1400 = vst [vmem:[%s242 + $0xd0] sm:$0xff] %v1352
          %1401 = vst [vmem:[%s242 + $0xd8] sm:$0xff] %v1353
          %1402 = vst [vmem:[%s242 + $0xe0] sm:$0xff] %v1354
          %1403 = vst [vmem:[%s242 + $0xe8] sm:$0xff] %v1355
          %1404 = vst [vmem:[%s242 + $0xf0] sm:$0xff] %v1356
          %1405 = vst [vmem:[%s242 + $0xf8] sm:$0xff] %v1357
          %1406 = vst [vmem:[%s242 + $0x100] sm:$0xff] %v1358
          %1407 = vst [vmem:[%s242 + $0x108] sm:$0xff] %v1359
          %1408 = vst [vmem:[%s242 + $0x110] sm:$0xff] %v1360
          %1409 = vst [vmem:[%s242 + $0x118] sm:$0xff] %v1361
          %1410 = vst [vmem:[%s242 + $0x120] sm:$0xff] %v1362
          %1411 = vst [vmem:[%s242 + $0x128] sm:$0xff] %v1363
          %1412 = vst [vmem:[%s242 + $0x130] sm:$0xff] %v1364
          %1413 = vst [vmem:[%s242 + $0x138] sm:$0xff] %v1365
          %1414 = vst [vmem:[%s242 + $0x140] sm:$0xff] %v1366
          %1415 = vst [vmem:[%s242 + $0x148] sm:$0xff] %v1367
          %1416 = vst [vmem:[%s242 + $0x150] sm:$0xff] %v1368
          %1417 = vst [vmem:[%s242 + $0x158] sm:$0xff] %v1369
          %1418 = vst [vmem:[%s242 + $0x160] sm:$0xff] %v1370
          %1419 = vst [vmem:[%s242 + $0x168] sm:$0xff] %v1371
          %1420 = vst [vmem:[%s242 + $0x170] sm:$0xff] %v1372
          %1421 = vst [vmem:[%s242 + $0x178] sm:$0xff] %v1373
        $region56: #{tpu_custom_call.1} parent=31 // pred_fallthru
          _
        %s1422 = sand.u32 %s116, 1
        %s1423 = scalar_lea.sflag [#allocation5], %s1422
        %s1424 = sand.u32 %s116, 1
        %s1425 = smul.addr %s1424, 384
        %s1426 = scalar_lea.vmem [#allocation9], %s1425
        // Predicated region
        $region57: #{tpu_custom_call.1} parent=31 // pred_check
          %p1427 = pneg %p126
        $region58: #{tpu_custom_call.1} parent=31 // pred_check_branch
          %1429 = sbr.rel (%p1427) target = $region60
        $region59: #{tpu_custom_call.1} parent=31 // pred_region
          %s1430 = smul.u32 24, %s25
          %s1432 = ssub.s32 6144, 6144
          %1433 = vsyncadd %s1423, %s1432
          %s1434 = smul.addr %s1430, 2
          %s1435 = smul.addr %s1434, 128
          %s1436 = scalar_lea.hbm %s3, %s1435
          %s1437 = sshll.u32 %s1426, 4
          %s1438 = int_to_ptr.vmem [resolvable:$true] %s1437
          %1443 = dma.vmem_to_hbm [thread:$0]  %s1438, 6144, %s1436, %s1423, 256, 256, 16
        $region60: #{tpu_custom_call.1} parent=31 // pred_fallthru
          _
      $region32: #{tpu_custom_call.1} parent=5 // pred_fallthru
        _
      %p1444 = scmp.le.s32.totalorder 2, %s16
      // Predicated region
      $region61: #{tpu_custom_call.1} parent=5 // pred_check
        %p1445 = pneg %p1444
      $region62: #{tpu_custom_call.1} parent=5 // pred_check_branch
        %1447 = sbr.rel (%p1445) target = $region64
      $region63: #{tpu_custom_call.1} parent=5 // pred_region
        %s1448 = ssub.s32 %s16, 2
        // Predicated region
        $region65: #{tpu_custom_call.1} parent=63 // pred_check
          %p1449 = pneg %p132
        $region66: #{tpu_custom_call.1} parent=63 // pred_check_branch
          %1451 = sbr.rel (%p1449) target = $region68
        $region67: #{tpu_custom_call.1} parent=63 // pred_region
          %s1452 = sand.u32 %s117, 1
          %s1453 = scalar_lea.sflag [#allocation5], %s1452
          %s1454 = sand.u32 %s117, 1
          %s1455 = smul.addr %s1454, 384
          %s1456 = scalar_lea.vmem [#allocation9], %s1455
          %1457 = dma.done %s1453, 6144
        $region68: #{tpu_custom_call.1} parent=63 // pred_fallthru
          _
      $region64: #{tpu_custom_call.1} parent=5 // pred_fallthru
        _
    $region6: #{tpu_custom_call.1} parent=1 // loop_footer
      %s20 = sadd.s32 1, %s16
    $region7: #{tpu_custom_call.1} parent=1 // loop_footer_branch
      %15 = sbr.rel target = $region3
    $region8: #{tpu_custom_call.1} parent=1 // loop_exit
      _
    %1458 = vsyncpa [#allocation4], 1
    %s1459 = scalar_lea.sflag [#allocation4], 1
    %1460 = vsyncpa %s1459, 1
    %1461 = vsyncpa [#allocation7], 1
    %1462 = vsyncpa [#allocation5], 1
    %s1463 = scalar_lea.sflag [#allocation5], 1
    %1464 = vsyncpa %s1463, 1

</llo_original>
